<compile_context>
chip_gen: v5e
topology: v5e:2x2
jax: 0.10.0
libtpu: 0.0.40
codegen_flags: <defaults>
</compile_context>

<pallas_src>
import jax
import jax.numpy as jnp
from jax.experimental import pallas as pl
from jax.experimental.pallas import tpu as pltpu


# ----------------------------------------------------------------------------
# Kernel
# ----------------------------------------------------------------------------
def _make_kernel(*, G, hd, recompute_kv, has_attn, compute_dtype):
    """Builds the kernel body for one (batch, q-tile, head-group) grid step."""

    def kernel(*refs):
        if has_attn:
            (q_ref, k_ref, v_ref,
             wq_ref, bq_ref, wk_ref, bk_ref, wv_ref, bv_ref, wo_ref, bo_ref,
             out_ref, attn_ref, kproj_ref, vproj_ref) = refs
        else:
            (q_ref, k_ref, v_ref,
             wq_ref, bq_ref, wk_ref, bk_ref, wv_ref, bv_ref, wo_ref, bo_ref,
             out_ref, kproj_ref, vproj_ref) = refs
            attn_ref = None

        qi = pl.program_id(1)   # query-tile index
        g = pl.program_id(2)    # head-group index (innermost)
        cdt = compute_dtype

        def split_heads(x):
            # (T, G*hd) -> (G, T, hd) via static lane slices (no 3-D transpose).
            return jnp.stack([x[:, h * hd:(h + 1) * hd] for h in range(G)],
                             axis=0)

        # ---- K/V projection for this head group. Cached in VMEM scratch per
        #      batch (qi == 0) and reused across q tiles; recomputed per q-tile
        #      only in q-parallel mode.
        def project_kv():
            k = k_ref[0]                                                # (S, H) bf16
            v = v_ref[0]
            kh = (jnp.dot(k, wk_ref[g], preferred_element_type=jnp.float32)
                  + bk_ref[g]).astype(cdt)                              # (S, G*hd)
            vh = (jnp.dot(v, wv_ref[g], preferred_element_type=jnp.float32)
                  + bv_ref[g]).astype(cdt)
            kproj_ref[g] = split_heads(kh)                              # (G, S, hd)
            vproj_ref[g] = split_heads(vh)

        if recompute_kv:
            project_kv()
        else:
            pl.when(qi == 0)(project_kv)

        kh = kproj_ref[g]                                               # (G, S, hd)
        vh = vproj_ref[g]

        # ---- Q projection for this (q tile, group); 1/sqrt(hd) folded into
        #      wq/bq at prep time. Full MXU width (N = G*hd).
        q = q_ref[0]                                                    # (tq, H) bf16
        qh = (jnp.dot(q, wq_ref[g], preferred_element_type=jnp.float32)
              + bq_ref[g]).astype(cdt)                                  # (tq, G*hd)
        qh = split_heads(qh)                                            # (G, tq, hd)

        # ---- scores = Qh Kh^T, batched over the head group (no transposes).
        s = jnp.einsum('gtd,gsd->gts', qh, kh,
                       preferred_element_type=jnp.float32)              # (G, tq, S)

        # TODO(synk): mask != None path (masked_fill with -1e10) not implemented.

        # ---- softmax over keys (f32); denominator reciprocal on the EUP.
        m = jnp.max(s, axis=-1, keepdims=True)
        e = jnp.exp(s - m)
        inv = pl.reciprocal(jnp.sum(e, axis=-1, keepdims=True), approx=True)

        # TODO(synk): training-mode dropout on the probabilities (eval == identity).

        if attn_ref is not None:
            a = e * inv                                                 # (G, tq, S)
            attn_ref[0] = a.astype(attn_ref.dtype)
            ctx = jnp.einsum('gts,gsd->gtd', a.astype(cdt), vh,
                             preferred_element_type=jnp.float32)        # (G, tq, hd)
        else:
            # No attention output emitted: normalize after the AV matmul
            # ((tq, hd) multiply instead of (tq, S)).
            ctx = jnp.einsum('gts,gsd->gtd', e.astype(cdt), vh,
                             preferred_element_type=jnp.float32) * inv

        # ---- this group's contribution to the output projection (K = G*hd).
        ctx = jnp.concatenate([ctx[h] for h in range(G)], axis=-1).astype(cdt)
        contrib = jnp.dot(ctx, wo_ref[g],
                          preferred_element_type=jnp.float32)           # (tq, H)

        # Accumulate over head groups into the resident f32 output block
        # (initialize with the output bias at the first group).
        @pl.when(g == 0)
        def _():
            out_ref[0] = jnp.broadcast_to(bo_ref[...],
                                          contrib.shape).astype(out_ref.dtype)
        out_ref[0] += contrib.astype(out_ref.dtype)

    return kernel


# ----------------------------------------------------------------------------
# Parameter prep (PyTorch nn.Linear layout -> group-major kernel layout)
# ----------------------------------------------------------------------------
def _prep_params(params, *, n_heads, group, compute_dtype, inv_scale):
    H = params["wq"].shape[0]
    hd = H // n_heads
    n_groups = n_heads // group
    Ghd = group * hd

    def qkv_w(w, scale=1.0):
        # torch weight (out, in) -> W^T (in=H, out=H) -> (n_groups, H, G*hd)
        wt = jnp.transpose(jnp.asarray(w, jnp.float32), (1, 0)) * scale
        return wt.reshape(H, n_groups, Ghd).transpose(1, 0, 2).astype(compute_dtype)

    def qkv_b(b, scale=1.0):
        # bias (1, H) or (H,) -> (n_groups, 1, G*hd), kept f32
        return (jnp.asarray(b, jnp.float32).reshape(n_groups, 1, Ghd) * scale)

    wo = (jnp.transpose(jnp.asarray(params["wo"], jnp.float32), (1, 0))
          .reshape(n_groups, Ghd, H).astype(compute_dtype))
    bo = jnp.asarray(params["bo"], jnp.float32).reshape(1, H)
    return dict(
        wq=qkv_w(params["wq"], inv_scale), bq=qkv_b(params["bq"], inv_scale),
        wk=qkv_w(params["wk"]), bk=qkv_b(params["bk"]),
        wv=qkv_w(params["wv"]), bv=qkv_b(params["bv"]),
        wo=wo, bo=bo)


# ----------------------------------------------------------------------------
# VMEM budgeting / tile selection
# ----------------------------------------------------------------------------
def _vmem_physical_bytes():
    try:
        info = pltpu.get_tpu_info()
        for attr in ("vmem_capacity_bytes", "vmem_bytes"):
            v = getattr(info, attr, None)
            if v:
                return int(v)
    except Exception:
        pass
    return 64 * 1024 * 1024   # conservative (v7x per-core VMEM)


def _estimate_vmem_bytes(block_q, S, H, n_heads, G, hd,
                         attn_itemsize, compute_itemsize):
    n_groups = n_heads // G
    Ghd = G * hd
    pad = lambda n, m: -(-int(n) // m) * m
    lane = lambda n: pad(n, 128)
    sub = lambda n: pad(n, 8)
    f32 = 4
    w = 2 * compute_itemsize * n_groups * (3 * sub(H) * lane(Ghd)
                                           + sub(Ghd) * lane(H))
    b = 2 * f32 * (3 * n_groups * sub(1) * lane(Ghd) + sub(1) * lane(H))
    q = 2 * compute_itemsize * sub(block_q) * lane(H)
    kv = 2 * 2 * compute_itemsize * sub(S) * lane(H)
    out = 2 * f32 * sub(block_q) * lane(H)
    attn = 2 * attn_itemsize * G * sub(block_q) * lane(S)
    scratch = 2 * compute_itemsize * n_heads * sub(S) * lane(hd)
    tmp = 3 * f32 * G * sub(block_q) * lane(S)        # softmax temporaries
    return w + b + q + kv + out + attn + scratch + tmp


def _pick_block_q(Lq, budget, est_fn):
    candidates = [Lq] + [c for c in (512, 256, 128) if Lq % c == 0 and c < Lq]
    for c in candidates:
        if est_fn(c) <= budget:
            return c
    return candidates[-1]


# ----------------------------------------------------------------------------
# Wrapper
# ----------------------------------------------------------------------------
def multi_head_attention(query, key, value, params, *, n_heads,
                         block_q=None, group_heads=None,
                         compute_dtype=jnp.bfloat16,
                         attn_dtype=jnp.float32,
                         return_attention=True,
                         q_parallel=None):
    """query: [B, Lq, H]; key/value: [B, S, H] (float32). params: torch layout.

    Returns (x: [B, Lq, H] f32, attention: [B, n_heads, Lq, S] attn_dtype) when
    return_attention=True (module semantics), else just x.
    """
    B, Lq, H = query.shape
    Bk, S, Hk = key.shape
    assert value.shape == key.shape and Bk == B and Hk == H
    assert H % n_heads == 0
    hd = H // n_heads
    inv_scale = 1.0 / (float(hd) ** 0.5)

    # ---- head-group size: smallest divisor of n_heads with G*hd >= 256
    #      (fills the v6e/v7x MXU width; also fine on v5e's 128-wide MXU).
    if group_heads is None:
        G = n_heads
        for cand in range(1, n_heads + 1):
            if n_heads % cand == 0 and cand * hd >= 256:
                G = cand
                break
    else:
        G = group_heads
    assert n_heads % G == 0
    n_groups = n_heads // G
    Ghd = G * hd

    # ---- block_q / vmem limit from a per-generation VMEM budget.
    cds = jnp.dtype(compute_dtype).itemsize
    attn_itemsize = jnp.dtype(attn_dtype).itemsize if return_attention else 0
    est = lambda tq: _estimate_vmem_bytes(tq, S, H, n_heads, G, hd,
                                          attn_itemsize, cds)
    physical = _vmem_physical_bytes()
    budget = min(int(physical * 0.7), 96 * 1024 * 1024)
    if block_q is None:
        block_q = _pick_block_q(Lq, budget, est)
    assert Lq % block_q == 0 and (block_q == Lq or block_q % 8 == 0)
    q_tiles = Lq // block_q
    vmem_limit = int(min(physical * 0.85,
                         max(64 * 1024 * 1024, est(block_q) * 1.5)))

    # ---- dual-TC strategy: for batch==1, recompute the K/V projection per
    #      q-tile so the q-tile axis can be parallel (v7x megacore).
    if q_parallel is None:
        q_parallel = (B == 1 and q_tiles > 1)
    dims = ("parallel", "parallel" if q_parallel else "arbitrary", "arbitrary")

    p = _prep_params(params, n_heads=n_heads, group=G,
                     compute_dtype=compute_dtype, inv_scale=inv_scale)

    # Stage activations in compute dtype (halves HBM->VMEM bytes and VMEM).
    q_in = query.astype(compute_dtype)
    k_in = key.astype(compute_dtype)
    v_in = value.astype(compute_dtype)

    kernel = _make_kernel(G=G, hd=hd, recompute_kv=q_parallel,
                          has_attn=return_attention,
                          compute_dtype=compute_dtype)

    # grid = (batch, q_tiles, head groups); groups innermost (output accumulation).
    q_spec = pl.BlockSpec((1, block_q, H), lambda b, qi, g: (b, qi, 0))
    kv_spec = pl.BlockSpec((1, S, H), lambda b, qi, g: (b, 0, 0))
    # Weights/biases fully resident (constant index_map), indexed by g in-kernel.
    w_spec = pl.BlockSpec((n_groups, H, Ghd), lambda b, qi, g: (0, 0, 0))
    b_spec = pl.BlockSpec((n_groups, 1, Ghd), lambda b, qi, g: (0, 0, 0))
    wo_spec = pl.BlockSpec((n_groups, Ghd, H), lambda b, qi, g: (0, 0, 0))
    bo_spec = pl.BlockSpec((1, H), lambda b, qi, g: (0, 0))

    x_shape = jax.ShapeDtypeStruct((B, Lq, H), jnp.float32)
    x_spec = pl.BlockSpec((1, block_q, H), lambda b, qi, g: (b, qi, 0))
    if return_attention:
        out_shape = (x_shape,
                     jax.ShapeDtypeStruct((B, n_heads, Lq, S), attn_dtype))
        out_specs = (x_spec,
                     pl.BlockSpec((1, G, block_q, S),
                                  lambda b, qi, g: (b, g, qi, 0)))
    else:
        out_shape = x_shape
        out_specs = x_spec

    fn = pl.pallas_call(
        kernel,
        out_shape=out_shape,
        grid_spec=pltpu.PrefetchScalarGridSpec(
            num_scalar_prefetch=0,
            grid=(B, q_tiles, n_groups),
            in_specs=[
                q_spec, kv_spec, kv_spec,       # q, k, v
                w_spec, b_spec,                 # fc_q (scale folded)
                w_spec, b_spec,                 # fc_k
                w_spec, b_spec,                 # fc_v
                wo_spec, bo_spec,               # fc_o
            ],
            out_specs=out_specs,
            scratch_shapes=[
                pltpu.VMEM((n_groups, G, S, hd), compute_dtype),  # K proj cache
                pltpu.VMEM((n_groups, G, S, hd), compute_dtype),  # V proj cache
            ],
        ),
        compiler_params=pltpu.CompilerParams(
            dimension_semantics=dims,
            vmem_limit_bytes=vmem_limit,
        ),
    )

    return fn(q_in, k_in, v_in,
              p["wq"], p["bq"], p["wk"], p["bk"],
              p["wv"], p["bv"], p["wo"], p["bo"])


# ----------------------------------------------------------------------------
# Reference / init / demo
# ----------------------------------------------------------------------------
def _reference_mha(query, key, value, params, n_heads):
    """Pure-JAX f32 reference matching the PyTorch module (mask=None, eval)."""
    H = query.shape[-1]
    hd = H // n_heads

    def linear(x, w, b):
        return x @ jnp.transpose(w) + jnp.reshape(b, (-1,))

    def split(x):
        B, L, _ = x.shape
        return x.reshape(B, L, n_heads, hd).transpose(0, 2, 1, 3)

    Q = split(linear(query, params["wq"], params["bq"]))
    K = split(linear(key, params["wk"], params["bk"]))
    V = split(linear(value, params["wv"], params["bv"]))
    s = jnp.einsum('bhqd,bhkd->bhqk', Q, K) / jnp.sqrt(jnp.float32(hd))
    a = jax.nn.softmax(s, axis=-1)
    x = jnp.einsum('bhqk,bhkd->bhqd', a, V)
    B, _, L, _ = x.shape
    x = x.transpose(0, 2, 1, 3).reshape(B, L, H)
    x = linear(x, params["wo"], params["bo"])
    return x, a


def init_params(key, hid_dim):
    """Deterministic synthetic init for the four nn.Linear(hid_dim, hid_dim)
    in PyTorch layout: W (out,in), b (1,out)."""
    ks = jax.random.split(key, 8)
    bound = 1.0 / jnp.sqrt(jnp.float32(hid_dim))

    def lin(kw, kb):
        w = jax.random.uniform(kw, (hid_dim, hid_dim), jnp.float32, -bound, bound)
        b = jax.random.uniform(kb, (1, hid_dim), jnp.float32, -bound, bound)
        return w, b

    wq, bq = lin(ks[0], ks[1])
    wk, bk = lin(ks[2], ks[3])
    wv, bv = lin(ks[4], ks[5])
    wo, bo = lin(ks[6], ks[7])
    return dict(wq=wq, bq=bq, wk=wk, bk=bk, wv=wv, bv=bv, wo=wo, bo=bo)


if __name__ == "__main__":
    # Small shapes consistent with the module's forward.
    batch, seq, hid_dim, n_heads = 2, 8, 32, 4

    root = jax.random.PRNGKey(0)
    k_q, k_k, k_v, k_p = jax.random.split(root, 4)

    query = jax.random.normal(k_q, (batch, seq, hid_dim), jnp.float32)
    key_ = jax.random.normal(k_k, (batch, seq, hid_dim), jnp.float32)
    value = jax.random.normal(k_v, (batch, seq, hid_dim), jnp.float32)
    params = init_params(k_p, hid_dim)

    # Default path: returns (x, attention) like the PyTorch module.
    x, attn = multi_head_attention(query, key_, value, params, n_heads=n_heads)
    jax.block_until_ready((x, attn))
    assert x.shape == (batch, seq, hid_dim)
    assert attn.shape == (batch, n_heads, seq, seq)
    assert bool(jnp.all(jnp.isfinite(x))) and bool(jnp.all(jnp.isfinite(attn)))

    # Tolerance check vs. a pure-JAX f32 reference (bf16 MXU + approx recip).
    x_ref, attn_ref = _reference_mha(query, key_, value, params, n_heads)
    assert float(jnp.max(jnp.abs(x - x_ref))) < 5e-2
    assert float(jnp.max(jnp.abs(attn - attn_ref))) < 5e-2

    # Also exercise the no-attention-output + q-parallel (recompute K/V) path.
    x1 = multi_head_attention(query[:1], key_[:1], value[:1], params,
                              n_heads=n_heads, return_attention=False,
                              q_parallel=True)
    jax.block_until_ready(x1)
    assert float(jnp.max(jnp.abs(x1 - x_ref[:1]))) < 5e-2

    print("KERNEL_OK")
</pallas_src>

<mosaic_0001>
module attributes {stable_mosaic.version = 11 : i64} {
  func.func @kernel(%arg0: i32, %arg1: i32, %arg2: i32, %arg3: memref<1x8x32xbf16, #tpu.memory_space<vmem>>, %arg4: memref<1x8x32xbf16, #tpu.memory_space<vmem>>, %arg5: memref<1x8x32xbf16, #tpu.memory_space<vmem>>, %arg6: memref<1x32x32xbf16, #tpu.memory_space<vmem>>, %arg7: memref<1x1x32xf32, #tpu.memory_space<vmem>>, %arg8: memref<1x32x32xbf16, #tpu.memory_space<vmem>>, %arg9: memref<1x1x32xf32, #tpu.memory_space<vmem>>, %arg10: memref<1x32x32xbf16, #tpu.memory_space<vmem>>, %arg11: memref<1x1x32xf32, #tpu.memory_space<vmem>>, %arg12: memref<1x32x32xbf16, #tpu.memory_space<vmem>>, %arg13: memref<1x32xf32, #tpu.memory_space<vmem>>, %arg14: memref<1x8x32xf32, #tpu.memory_space<vmem>>, %arg15: memref<1x4x8x8xf32, #tpu.memory_space<vmem>>, %arg16: memref<1x4x8x8xbf16, #tpu.memory_space<vmem>>, %arg17: memref<1x4x8x8xbf16, #tpu.memory_space<vmem>>) attributes {dimension_semantics = [#tpu.dimension_semantics<parallel>, #tpu.dimension_semantics<arbitrary>, #tpu.dimension_semantics<arbitrary>], iteration_bounds = array<i64: 2, 1, 1>, scalar_prefetch = 0 : i64, scratch_operands = 2 : i64, tpu.core_type = #tpu.core_type<tc>, window_params = [{transform_indices = @transform_0, window_bounds = array<i64: 1, 8, 32>}, {transform_indices = @transform_1, window_bounds = array<i64: 1, 8, 32>}, {transform_indices = @transform_2, window_bounds = array<i64: 1, 8, 32>}, {pipeline_mode = #tpu.pipeline_mode<synchronous>, transform_indices = @transform_3, window_bounds = array<i64: 1, 32, 32>}, {pipeline_mode = #tpu.pipeline_mode<synchronous>, transform_indices = @transform_4, window_bounds = array<i64: 1, 1, 32>}, {pipeline_mode = #tpu.pipeline_mode<synchronous>, transform_indices = @transform_5, window_bounds = array<i64: 1, 32, 32>}, {pipeline_mode = #tpu.pipeline_mode<synchronous>, transform_indices = @transform_6, window_bounds = array<i64: 1, 1, 32>}, {pipeline_mode = #tpu.pipeline_mode<synchronous>, transform_indices = @transform_7, window_bounds = array<i64: 1, 32, 32>}, {pipeline_mode = #tpu.pipeline_mode<synchronous>, transform_indices = @transform_8, window_bounds = array<i64: 1, 1, 32>}, {pipeline_mode = #tpu.pipeline_mode<synchronous>, transform_indices = @transform_9, window_bounds = array<i64: 1, 32, 32>}, {pipeline_mode = #tpu.pipeline_mode<synchronous>, transform_indices = @transform_10, window_bounds = array<i64: 1, 32>}, {transform_indices = @transform_11, window_bounds = array<i64: 1, 8, 32>}, {transform_indices = @transform_12, window_bounds = array<i64: 1, 4, 8, 8>}]} {
    %c0_i32 = arith.constant 0 : i32
    %0 = arith.cmpi eq, %arg1, %c0_i32 : i32
    %1 = arith.extui %0 : i1 to i32
    %c0_i32_0 = arith.constant 0 : i32
    %2 = arith.cmpi ne, %1, %c0_i32_0 : i32
    scf.if %2 {
      %c0_32 = arith.constant 0 : index
      %c0_33 = arith.constant 0 : index
      %c0_34 = arith.constant 0 : index
      %69 = vector.load %arg4[%c0_32, %c0_33, %c0_34] : memref<1x8x32xbf16, #tpu.memory_space<vmem>>, vector<1x8x32xbf16>
      %70 = vector.shape_cast %69 : vector<1x8x32xbf16> to vector<8x32xbf16>
      %c0_35 = arith.constant 0 : index
      %c0_36 = arith.constant 0 : index
      %c0_37 = arith.constant 0 : index
      %71 = vector.load %arg5[%c0_35, %c0_36, %c0_37] : memref<1x8x32xbf16, #tpu.memory_space<vmem>>, vector<1x8x32xbf16>
      %72 = vector.shape_cast %71 : vector<1x8x32xbf16> to vector<8x32xbf16>
      %73 = arith.index_cast %arg2 : i32 to index
      %c0_38 = arith.constant 0 : index
      %c0_39 = arith.constant 0 : index
      %74 = vector.load %arg8[%73, %c0_38, %c0_39] : memref<1x32x32xbf16, #tpu.memory_space<vmem>>, vector<1x32x32xbf16>
      %75 = vector.shape_cast %74 : vector<1x32x32xbf16> to vector<32x32xbf16>
      %cst_40 = arith.constant dense<0.000000e+00> : vector<8x32xf32>
      %76 = tpu.matmul %70, %75, %cst_40 {dimension_numbers = #tpu.dot_dimension_numbers<[1], [0], [0], [1], [0, 0, 1, 1], [], []>} : vector<8x32xbf16>, vector<32x32xbf16>, vector<8x32xf32> -> vector<8x32xf32>
      %77 = arith.index_cast %arg2 : i32 to index
      %c0_41 = arith.constant 0 : index
      %c0_42 = arith.constant 0 : index
      %78 = vector.load %arg9[%77, %c0_41, %c0_42] : memref<1x1x32xf32, #tpu.memory_space<vmem>>, vector<1x1x32xf32>
      %79 = vector.shape_cast %78 : vector<1x1x32xf32> to vector<1x32xf32>
      %80 = vector.broadcast %79 : vector<1x32xf32> to vector<8x32xf32>
      %81 = arith.addf %76, %80 : vector<8x32xf32>
      %82 = arith.truncf %81 : vector<8x32xf32> to vector<8x32xbf16>
      %83 = arith.index_cast %arg2 : i32 to index
      %c0_43 = arith.constant 0 : index
      %c0_44 = arith.constant 0 : index
      %84 = vector.load %arg10[%83, %c0_43, %c0_44] : memref<1x32x32xbf16, #tpu.memory_space<vmem>>, vector<1x32x32xbf16>
      %85 = vector.shape_cast %84 : vector<1x32x32xbf16> to vector<32x32xbf16>
      %cst_45 = arith.constant dense<0.000000e+00> : vector<8x32xf32>
      %86 = tpu.matmul %72, %85, %cst_45 {dimension_numbers = #tpu.dot_dimension_numbers<[1], [0], [0], [1], [0, 0, 1, 1], [], []>} : vector<8x32xbf16>, vector<32x32xbf16>, vector<8x32xf32> -> vector<8x32xf32>
      %87 = arith.index_cast %arg2 : i32 to index
      %c0_46 = arith.constant 0 : index
      %c0_47 = arith.constant 0 : index
      %88 = vector.load %arg11[%87, %c0_46, %c0_47] : memref<1x1x32xf32, #tpu.memory_space<vmem>>, vector<1x1x32xf32>
      %89 = vector.shape_cast %88 : vector<1x1x32xf32> to vector<1x32xf32>
      %90 = vector.broadcast %89 : vector<1x32xf32> to vector<8x32xf32>
      %91 = arith.addf %86, %90 : vector<8x32xf32>
      %92 = arith.truncf %91 : vector<8x32xf32> to vector<8x32xbf16>
      %93 = vector.extract_strided_slice %82 {offsets = [0, 0], sizes = [8, 8], strides = [1, 1]} : vector<8x32xbf16> to vector<8x8xbf16>
      %94 = vector.extract_strided_slice %82 {offsets = [0, 8], sizes = [8, 8], strides = [1, 1]} : vector<8x32xbf16> to vector<8x8xbf16>
      %95 = vector.extract_strided_slice %82 {offsets = [0, 16], sizes = [8, 8], strides = [1, 1]} : vector<8x32xbf16> to vector<8x8xbf16>
      %96 = vector.extract_strided_slice %82 {offsets = [0, 24], sizes = [8, 8], strides = [1, 1]} : vector<8x32xbf16> to vector<8x8xbf16>
      %97 = vector.shape_cast %93 : vector<8x8xbf16> to vector<1x8x8xbf16>
      %98 = vector.shape_cast %94 : vector<8x8xbf16> to vector<1x8x8xbf16>
      %99 = vector.shape_cast %95 : vector<8x8xbf16> to vector<1x8x8xbf16>
      %100 = vector.shape_cast %96 : vector<8x8xbf16> to vector<1x8x8xbf16>
      %101 = tpu.concatenate %97, %98, %99, %100 in 0 : vector<1x8x8xbf16>, vector<1x8x8xbf16>, vector<1x8x8xbf16>, vector<1x8x8xbf16> -> vector<4x8x8xbf16>
      %102 = arith.index_cast %arg2 : i32 to index
      %c0_48 = arith.constant 0 : index
      %c0_49 = arith.constant 0 : index
      %c0_50 = arith.constant 0 : index
      %103 = vector.load %arg16[%102, %c0_48, %c0_49, %c0_50] : memref<1x4x8x8xbf16, #tpu.memory_space<vmem>>, vector<1x4x8x8xbf16>
      %104 = vector.shape_cast %103 : vector<1x4x8x8xbf16> to vector<4x8x8xbf16>
      %105 = vector.shape_cast %101 : vector<4x8x8xbf16> to vector<1x4x8x8xbf16>
      tpu.vector_store %arg16[%102, %c0_48, %c0_49, %c0_50], %105 {strides = array<i32>} : memref<1x4x8x8xbf16, #tpu.memory_space<vmem>>, vector<1x4x8x8xbf16>,
      %106 = vector.extract_strided_slice %92 {offsets = [0, 0], sizes = [8, 8], strides = [1, 1]} : vector<8x32xbf16> to vector<8x8xbf16>
      %107 = vector.extract_strided_slice %92 {offsets = [0, 8], sizes = [8, 8], strides = [1, 1]} : vector<8x32xbf16> to vector<8x8xbf16>
      %108 = vector.extract_strided_slice %92 {offsets = [0, 16], sizes = [8, 8], strides = [1, 1]} : vector<8x32xbf16> to vector<8x8xbf16>
      %109 = vector.extract_strided_slice %92 {offsets = [0, 24], sizes = [8, 8], strides = [1, 1]} : vector<8x32xbf16> to vector<8x8xbf16>
      %110 = vector.shape_cast %106 : vector<8x8xbf16> to vector<1x8x8xbf16>
      %111 = vector.shape_cast %107 : vector<8x8xbf16> to vector<1x8x8xbf16>
      %112 = vector.shape_cast %108 : vector<8x8xbf16> to vector<1x8x8xbf16>
      %113 = vector.shape_cast %109 : vector<8x8xbf16> to vector<1x8x8xbf16>
      %114 = tpu.concatenate %110, %111, %112, %113 in 0 : vector<1x8x8xbf16>, vector<1x8x8xbf16>, vector<1x8x8xbf16>, vector<1x8x8xbf16> -> vector<4x8x8xbf16>
      %115 = arith.index_cast %arg2 : i32 to index
      %c0_51 = arith.constant 0 : index
      %c0_52 = arith.constant 0 : index
      %c0_53 = arith.constant 0 : index
      %116 = vector.load %arg17[%115, %c0_51, %c0_52, %c0_53] : memref<1x4x8x8xbf16, #tpu.memory_space<vmem>>, vector<1x4x8x8xbf16>
      %117 = vector.shape_cast %116 : vector<1x4x8x8xbf16> to vector<4x8x8xbf16>
      %118 = vector.shape_cast %114 : vector<4x8x8xbf16> to vector<1x4x8x8xbf16>
      tpu.vector_store %arg17[%115, %c0_51, %c0_52, %c0_53], %118 {strides = array<i32>} : memref<1x4x8x8xbf16, #tpu.memory_space<vmem>>, vector<1x4x8x8xbf16>,
    } else {
    }
    %3 = arith.index_cast %arg2 : i32 to index
    %c0 = arith.constant 0 : index
    %c0_1 = arith.constant 0 : index
    %c0_2 = arith.constant 0 : index
    %4 = vector.load %arg16[%3, %c0, %c0_1, %c0_2] : memref<1x4x8x8xbf16, #tpu.memory_space<vmem>>, vector<1x4x8x8xbf16>
    %5 = vector.shape_cast %4 : vector<1x4x8x8xbf16> to vector<4x8x8xbf16>
    %6 = arith.index_cast %arg2 : i32 to index
    %c0_3 = arith.constant 0 : index
    %c0_4 = arith.constant 0 : index
    %c0_5 = arith.constant 0 : index
    %7 = vector.load %arg17[%6, %c0_3, %c0_4, %c0_5] : memref<1x4x8x8xbf16, #tpu.memory_space<vmem>>, vector<1x4x8x8xbf16>
    %8 = vector.shape_cast %7 : vector<1x4x8x8xbf16> to vector<4x8x8xbf16>
    %c0_6 = arith.constant 0 : index
    %c0_7 = arith.constant 0 : index
    %c0_8 = arith.constant 0 : index
    %9 = vector.load %arg3[%c0_6, %c0_7, %c0_8] : memref<1x8x32xbf16, #tpu.memory_space<vmem>>, vector<1x8x32xbf16>
    %10 = vector.shape_cast %9 : vector<1x8x32xbf16> to vector<8x32xbf16>
    %11 = arith.index_cast %arg2 : i32 to index
    %c0_9 = arith.constant 0 : index
    %c0_10 = arith.constant 0 : index
    %12 = vector.load %arg6[%11, %c0_9, %c0_10] : memref<1x32x32xbf16, #tpu.memory_space<vmem>>, vector<1x32x32xbf16>
    %13 = vector.shape_cast %12 : vector<1x32x32xbf16> to vector<32x32xbf16>
    %cst = arith.constant dense<0.000000e+00> : vector<8x32xf32>
    %14 = tpu.matmul %10, %13, %cst {dimension_numbers = #tpu.dot_dimension_numbers<[1], [0], [0], [1], [0, 0, 1, 1], [], []>} : vector<8x32xbf16>, vector<32x32xbf16>, vector<8x32xf32> -> vector<8x32xf32>
    %15 = arith.index_cast %arg2 : i32 to index
    %c0_11 = arith.constant 0 : index
    %c0_12 = arith.constant 0 : index
    %16 = vector.load %arg7[%15, %c0_11, %c0_12] : memref<1x1x32xf32, #tpu.memory_space<vmem>>, vector<1x1x32xf32>
    %17 = vector.shape_cast %16 : vector<1x1x32xf32> to vector<1x32xf32>
    %18 = vector.broadcast %17 : vector<1x32xf32> to vector<8x32xf32>
    %19 = arith.addf %14, %18 : vector<8x32xf32>
    %20 = arith.truncf %19 : vector<8x32xf32> to vector<8x32xbf16>
    %21 = vector.extract_strided_slice %20 {offsets = [0, 0], sizes = [8, 8], strides = [1, 1]} : vector<8x32xbf16> to vector<8x8xbf16>
    %22 = vector.extract_strided_slice %20 {offsets = [0, 8], sizes = [8, 8], strides = [1, 1]} : vector<8x32xbf16> to vector<8x8xbf16>
    %23 = vector.extract_strided_slice %20 {offsets = [0, 16], sizes = [8, 8], strides = [1, 1]} : vector<8x32xbf16> to vector<8x8xbf16>
    %24 = vector.extract_strided_slice %20 {offsets = [0, 24], sizes = [8, 8], strides = [1, 1]} : vector<8x32xbf16> to vector<8x8xbf16>
    %25 = vector.shape_cast %21 : vector<8x8xbf16> to vector<1x8x8xbf16>
    %26 = vector.shape_cast %22 : vector<8x8xbf16> to vector<1x8x8xbf16>
    %27 = vector.shape_cast %23 : vector<8x8xbf16> to vector<1x8x8xbf16>
    %28 = vector.shape_cast %24 : vector<8x8xbf16> to vector<1x8x8xbf16>
    %29 = tpu.concatenate %25, %26, %27, %28 in 0 : vector<1x8x8xbf16>, vector<1x8x8xbf16>, vector<1x8x8xbf16>, vector<1x8x8xbf16> -> vector<4x8x8xbf16>
    "tpu.trace_start"() <{level = 10 : i32, message = "gtd,gsd->gts"}> : () -> ()
    %cst_13 = arith.constant dense<0.000000e+00> : vector<4x8x8xf32>
    %30 = tpu.matmul %29, %5, %cst_13 {dimension_numbers = #tpu.dot_dimension_numbers<[2], [2], [1], [1], [0, 0, 0, 1, 1, 1], [0], [0]>} : vector<4x8x8xbf16>, vector<4x8x8xbf16>, vector<4x8x8xf32> -> vector<4x8x8xf32>
    "tpu.trace_stop"() : () -> ()
    %cst_14 = arith.constant dense<0xFF800000> : vector<4x8xf32>
    %31 = vector.multi_reduction <maximumf>, %30, %cst_14 [2] : vector<4x8x8xf32> to vector<4x8xf32>
    %32 = vector.shape_cast %31 : vector<4x8xf32> to vector<4x8x1xf32>
    %33 = vector.broadcast %32 : vector<4x8x1xf32> to vector<4x8x8xf32>
    %34 = arith.subf %30, %33 : vector<4x8x8xf32>
    %35 = math.exp %34 : vector<4x8x8xf32>
    %cst_15 = arith.constant dense<0.000000e+00> : vector<4x8xf32>
    %36 = vector.multi_reduction <add>, %35, %cst_15 [2] : vector<4x8x8xf32> to vector<4x8xf32>
    %37 = vector.shape_cast %36 : vector<4x8xf32> to vector<4x8x1xf32>
    %38 = tpu.reciprocal %37 {approx = true} : vector<4x8x1xf32> -> vector<4x8x1xf32>
    %39 = vector.broadcast %38 : vector<4x8x1xf32> to vector<4x8x8xf32>
    %40 = arith.mulf %35, %39 : vector<4x8x8xf32>
    %c0_16 = arith.constant 0 : index
    %c0_17 = arith.constant 0 : index
    %c0_18 = arith.constant 0 : index
    %c0_19 = arith.constant 0 : index
    %41 = vector.load %arg15[%c0_16, %c0_17, %c0_18, %c0_19] : memref<1x4x8x8xf32, #tpu.memory_space<vmem>>, vector<1x4x8x8xf32>
    %42 = vector.shape_cast %41 : vector<1x4x8x8xf32> to vector<4x8x8xf32>
    %43 = vector.shape_cast %40 : vector<4x8x8xf32> to vector<1x4x8x8xf32>
    tpu.vector_store %arg15[%c0_16, %c0_17, %c0_18, %c0_19], %43 {strides = array<i32>} : memref<1x4x8x8xf32, #tpu.memory_space<vmem>>, vector<1x4x8x8xf32>,
    %44 = arith.truncf %40 : vector<4x8x8xf32> to vector<4x8x8xbf16>
    "tpu.trace_start"() <{level = 10 : i32, message = "gts,gsd->gtd"}> : () -> ()
    %cst_20 = arith.constant dense<0.000000e+00> : vector<4x8x8xf32>
    %45 = tpu.matmul %44, %8, %cst_20 {dimension_numbers = #tpu.dot_dimension_numbers<[2], [1], [1], [2], [0, 0, 0, 1, 1, 2], [0], [0]>} : vector<4x8x8xbf16>, vector<4x8x8xbf16>, vector<4x8x8xf32> -> vector<4x8x8xf32>
    "tpu.trace_stop"() : () -> ()
    %46 = vector.extract_strided_slice %45 {offsets = [0, 0, 0], sizes = [1, 8, 8], strides = [1, 1, 1]} : vector<4x8x8xf32> to vector<1x8x8xf32>
    %47 = vector.shape_cast %46 : vector<1x8x8xf32> to vector<8x8xf32>
    %48 = vector.extract_strided_slice %45 {offsets = [1, 0, 0], sizes = [1, 8, 8], strides = [1, 1, 1]} : vector<4x8x8xf32> to vector<1x8x8xf32>
    %49 = vector.shape_cast %48 : vector<1x8x8xf32> to vector<8x8xf32>
    %50 = vector.extract_strided_slice %45 {offsets = [2, 0, 0], sizes = [1, 8, 8], strides = [1, 1, 1]} : vector<4x8x8xf32> to vector<1x8x8xf32>
    %51 = vector.shape_cast %50 : vector<1x8x8xf32> to vector<8x8xf32>
    %52 = vector.extract_strided_slice %45 {offsets = [3, 0, 0], sizes = [1, 8, 8], strides = [1, 1, 1]} : vector<4x8x8xf32> to vector<1x8x8xf32>
    %53 = vector.shape_cast %52 : vector<1x8x8xf32> to vector<8x8xf32>
    %54 = tpu.concatenate %47, %49, %51, %53 in 1 : vector<8x8xf32>, vector<8x8xf32>, vector<8x8xf32>, vector<8x8xf32> -> vector<8x32xf32>
    %55 = arith.truncf %54 : vector<8x32xf32> to vector<8x32xbf16>
    %56 = arith.index_cast %arg2 : i32 to index
    %c0_21 = arith.constant 0 : index
    %c0_22 = arith.constant 0 : index
    %57 = vector.load %arg12[%56, %c0_21, %c0_22] : memref<1x32x32xbf16, #tpu.memory_space<vmem>>, vector<1x32x32xbf16>
    %58 = vector.shape_cast %57 : vector<1x32x32xbf16> to vector<32x32xbf16>
    %cst_23 = arith.constant dense<0.000000e+00> : vector<8x32xf32>
    %59 = tpu.matmul %55, %58, %cst_23 {dimension_numbers = #tpu.dot_dimension_numbers<[1], [0], [0], [1], [0, 0, 1, 1], [], []>} : vector<8x32xbf16>, vector<32x32xbf16>, vector<8x32xf32> -> vector<8x32xf32>
    %c0_i32_24 = arith.constant 0 : i32
    %60 = arith.cmpi eq, %arg2, %c0_i32_24 : i32
    %61 = arith.extui %60 : i1 to i32
    %c0_i32_25 = arith.constant 0 : i32
    %62 = arith.cmpi ne, %61, %c0_i32_25 : i32
    scf.if %62 {
      %c0_32 = arith.constant 0 : index
      %c0_33 = arith.constant 0 : index
      %69 = vector.load %arg13[%c0_32, %c0_33] : memref<1x32xf32, #tpu.memory_space<vmem>>, vector<1x32xf32>
      %70 = vector.shape_cast %69 : vector<1x32xf32> to vector<1x32xf32>
      %71 = vector.broadcast %70 : vector<1x32xf32> to vector<8x32xf32>
      %c0_34 = arith.constant 0 : index
      %c0_35 = arith.constant 0 : index
      %c0_36 = arith.constant 0 : index
      %72 = vector.load %arg14[%c0_34, %c0_35, %c0_36] : memref<1x8x32xf32, #tpu.memory_space<vmem>>, vector<1x8x32xf32>
      %73 = vector.shape_cast %72 : vector<1x8x32xf32> to vector<8x32xf32>
      %74 = vector.shape_cast %71 : vector<8x32xf32> to vector<1x8x32xf32>
      tpu.vector_store %arg14[%c0_34, %c0_35, %c0_36], %74 {strides = array<i32>} : memref<1x8x32xf32, #tpu.memory_space<vmem>>, vector<1x8x32xf32>,
    } else {
    }
    %c0_26 = arith.constant 0 : index
    %c0_27 = arith.constant 0 : index
    %c0_28 = arith.constant 0 : index
    %63 = vector.load %arg14[%c0_26, %c0_27, %c0_28] : memref<1x8x32xf32, #tpu.memory_space<vmem>>, vector<1x8x32xf32>
    %64 = vector.shape_cast %63 : vector<1x8x32xf32> to vector<8x32xf32>
    %65 = arith.addf %64, %59 : vector<8x32xf32>
    %c0_29 = arith.constant 0 : index
    %c0_30 = arith.constant 0 : index
    %c0_31 = arith.constant 0 : index
    %66 = vector.load %arg14[%c0_29, %c0_30, %c0_31] : memref<1x8x32xf32, #tpu.memory_space<vmem>>, vector<1x8x32xf32>
    %67 = vector.shape_cast %66 : vector<1x8x32xf32> to vector<8x32xf32>
    %68 = vector.shape_cast %65 : vector<8x32xf32> to vector<1x8x32xf32>
    tpu.vector_store %arg14[%c0_29, %c0_30, %c0_31], %68 {strides = array<i32>} : memref<1x8x32xf32, #tpu.memory_space<vmem>>, vector<1x8x32xf32>,
    return
  }
  func.func @transform_0(%arg0: i32, %arg1: i32, %arg2: i32) -> (i32, i32, i32) {
    %c0_i32 = arith.constant 0 : i32
    %c0_i32_0 = arith.constant 0 : i32
    return %arg0, %arg1, %c0_i32 : i32, i32, i32
  }
  func.func @transform_1(%arg0: i32, %arg1: i32, %arg2: i32) -> (i32, i32, i32) {
    %c0_i32 = arith.constant 0 : i32
    %c0_i32_0 = arith.constant 0 : i32
    %c0_i32_1 = arith.constant 0 : i32
    return %arg0, %c0_i32, %c0_i32_0 : i32, i32, i32
  }
  func.func @transform_2(%arg0: i32, %arg1: i32, %arg2: i32) -> (i32, i32, i32) {
    %c0_i32 = arith.constant 0 : i32
    %c0_i32_0 = arith.constant 0 : i32
    %c0_i32_1 = arith.constant 0 : i32
    return %arg0, %c0_i32, %c0_i32_0 : i32, i32, i32
  }
  func.func @transform_3(%arg0: i32, %arg1: i32, %arg2: i32) -> (i32, i32, i32) {
    %c0_i32 = arith.constant 0 : i32
    %c0_i32_0 = arith.constant 0 : i32
    %c0_i32_1 = arith.constant 0 : i32
    %c0_i32_2 = arith.constant 0 : i32
    return %c0_i32, %c0_i32_0, %c0_i32_1 : i32, i32, i32
  }
  func.func @transform_4(%arg0: i32, %arg1: i32, %arg2: i32) -> (i32, i32, i32) {
    %c0_i32 = arith.constant 0 : i32
    %c0_i32_0 = arith.constant 0 : i32
    %c0_i32_1 = arith.constant 0 : i32
    %c0_i32_2 = arith.constant 0 : i32
    return %c0_i32, %c0_i32_0, %c0_i32_1 : i32, i32, i32
  }
  func.func @transform_5(%arg0: i32, %arg1: i32, %arg2: i32) -> (i32, i32, i32) {
    %c0_i32 = arith.constant 0 : i32
    %c0_i32_0 = arith.constant 0 : i32
    %c0_i32_1 = arith.constant 0 : i32
    %c0_i32_2 = arith.constant 0 : i32
    return %c0_i32, %c0_i32_0, %c0_i32_1 : i32, i32, i32
  }
  func.func @transform_6(%arg0: i32, %arg1: i32, %arg2: i32) -> (i32, i32, i32) {
    %c0_i32 = arith.constant 0 : i32
    %c0_i32_0 = arith.constant 0 : i32
    %c0_i32_1 = arith.constant 0 : i32
    %c0_i32_2 = arith.constant 0 : i32
    return %c0_i32, %c0_i32_0, %c0_i32_1 : i32, i32, i32
  }
  func.func @transform_7(%arg0: i32, %arg1: i32, %arg2: i32) -> (i32, i32, i32) {
    %c0_i32 = arith.constant 0 : i32
    %c0_i32_0 = arith.constant 0 : i32
    %c0_i32_1 = arith.constant 0 : i32
    %c0_i32_2 = arith.constant 0 : i32
    return %c0_i32, %c0_i32_0, %c0_i32_1 : i32, i32, i32
  }
  func.func @transform_8(%arg0: i32, %arg1: i32, %arg2: i32) -> (i32, i32, i32) {
    %c0_i32 = arith.constant 0 : i32
    %c0_i32_0 = arith.constant 0 : i32
    %c0_i32_1 = arith.constant 0 : i32
    %c0_i32_2 = arith.constant 0 : i32
    return %c0_i32, %c0_i32_0, %c0_i32_1 : i32, i32, i32
  }
  func.func @transform_9(%arg0: i32, %arg1: i32, %arg2: i32) -> (i32, i32, i32) {
    %c0_i32 = arith.constant 0 : i32
    %c0_i32_0 = arith.constant 0 : i32
    %c0_i32_1 = arith.constant 0 : i32
    %c0_i32_2 = arith.constant 0 : i32
    return %c0_i32, %c0_i32_0, %c0_i32_1 : i32, i32, i32
  }
  func.func @transform_10(%arg0: i32, %arg1: i32, %arg2: i32) -> (i32, i32) {
    %c0_i32 = arith.constant 0 : i32
    %c0_i32_0 = arith.constant 0 : i32
    %c0_i32_1 = arith.constant 0 : i32
    return %c0_i32, %c0_i32_0 : i32, i32
  }
  func.func @transform_11(%arg0: i32, %arg1: i32, %arg2: i32) -> (i32, i32, i32) {
    %c0_i32 = arith.constant 0 : i32
    %c0_i32_0 = arith.constant 0 : i32
    return %arg0, %arg1, %c0_i32 : i32, i32, i32
  }
  func.func @transform_12(%arg0: i32, %arg1: i32, %arg2: i32) -> (i32, i32, i32, i32) {
    %c0_i32 = arith.constant 0 : i32
    %c0_i32_0 = arith.constant 0 : i32
    return %arg0, %arg2, %arg1, %c0_i32 : i32, i32, i32, i32
  }
}

</mosaic_0001>

<llo_original>
// kernel: tpu_custom_call.1
$region0: #{tpu_custom_call.1}
  #allocation0 [shape = 'u32[]', space=smem, size = 0x4, offset = 0x4, fixed_abs, tag = 'smem constant byte address 0x4 - core index']
  #allocation1 [shape = 'u32[72,128]{1,0:T(1,128)}', space=vmem, size = 0x9000, scoped, tag = 'internal scratch']
  #allocation2 [shape = 'bf16[1,4,8,8]{3,2,1,0:T(8,128)(2,1)}', space=vmem, size = 0x2000, scoped, tag = 'scratch operand']
  #allocation3 [shape = 'bf16[1,4,8,8]{3,2,1,0:T(8,128)(2,1)}', space=vmem, size = 0x2000, scoped, tag = 'scratch operand']
  %s0 = inlined_call_operand.hbm [shape: bf16[2,8,32], index: 0, kind: input, shape index: {}]
  %s1 = inlined_call_operand.hbm [shape: bf16[2,8,32], index: 1, kind: input, shape index: {}]
  %s2 = inlined_call_operand.hbm [shape: bf16[2,8,32], index: 2, kind: input, shape index: {}]
  %s3 = inlined_call_operand.hbm [shape: bf16[1,32,32], index: 3, kind: input, shape index: {}]
  %s4 = inlined_call_operand.vmem [shape: f32[1,1,32], index: 4, kind: input, shape index: {}]
  %s5 = inlined_call_operand.hbm [shape: bf16[1,32,32], index: 5, kind: input, shape index: {}]
  %s6 = inlined_call_operand.vmem [shape: f32[1,1,32], index: 6, kind: input, shape index: {}]
  %s7 = inlined_call_operand.hbm [shape: bf16[1,32,32], index: 7, kind: input, shape index: {}]
  %s8 = inlined_call_operand.vmem [shape: f32[1,1,32], index: 8, kind: input, shape index: {}]
  %s9 = inlined_call_operand.hbm [shape: bf16[1,32,32], index: 9, kind: input, shape index: {}]
  %s10 = inlined_call_operand.vmem [shape: f32[1,32], index: 10, kind: input, shape index: {}]
  %s11 = inlined_call_operand.hbm [shape: f32[2,8,32], index: 11, kind: output, shape index: {0}]
  %s12 = inlined_call_operand.hbm [shape: f32[2,4,8,8], index: 12, kind: output, shape index: {1}]
  %13 = xla_tuple %s11, %s12
  %s14 = sld [smem:[#allocation0]]
  $region121: #{tpu_custom_call.1} parent=0
    _
  %s16 = ssub.s32 1, %s14
  %s17 = scalar_select 0, %s16, %s14
  $region1: #{tpu_custom_call.1} parent=0
    #allocation4 [shape = 'u8[4096]{0}', space=vmem, size = 0x1000, scoped, tag = 'input window, operand 0']
    #allocation5 [shape = 's32[2]{0}', space=sflag, size = 0x8, scoped, tag = 'scoped memory for tpu_custom_call.1']
    #allocation6 [shape = 's32[2]{0}', space=sflag, size = 0x8, scoped, tag = 'scoped memory for tpu_custom_call.1']
    #allocation7 [shape = 'u8[4096]{0}', space=vmem, size = 0x1000, scoped, tag = 'input window, operand 1']
    #allocation8 [shape = 's32[2]{0}', space=sflag, size = 0x8, scoped, tag = 'scoped memory for tpu_custom_call.1']
    #allocation9 [shape = 'u8[4096]{0}', space=vmem, size = 0x1000, scoped, tag = 'input window, operand 2']
    #allocation10 [shape = 'u8[8192]{0}', space=vmem, size = 0x2000, scoped, tag = 'input window, operand 3, single buffered']
    #allocation11 [shape = 's32[1]{0}', space=sflag, size = 0x4, scoped, tag = 'scoped memory for tpu_custom_call.1']
    #allocation12 [shape = 'u8[8192]{0}', space=vmem, size = 0x2000, scoped, tag = 'input window, operand 5, single buffered']
    #allocation13 [shape = 'u8[8192]{0}', space=vmem, size = 0x2000, scoped, tag = 'input window, operand 7, single buffered']
    #allocation14 [shape = 's32[1]{0}', space=sflag, size = 0x4, scoped, tag = 'scoped memory for tpu_custom_call.1']
    #allocation15 [shape = 'u8[8192]{0}', space=vmem, size = 0x2000, scoped, tag = 'input window, operand 9, single buffered']
    #allocation16 [shape = 'u8[8192]{0}', space=vmem, size = 0x2000, scoped, tag = 'output window, operand 0']
    #allocation17 [shape = 'u8[32768]{0}', space=vmem, size = 0x8000, scoped, tag = 'output window, operand 1']
    #allocation18 [shape = 's32[2]{0}', space=sflag, size = 0x8, scoped, tag = 'scoped memory for tpu_custom_call.1']
    %18 = vsyncpa [#allocation5], 0
    %s19 = scalar_lea.sflag [#allocation5], 1
    %20 = vsyncpa %s19, 0
    %21 = vsyncpa [#allocation8], 0
    %s22 = scalar_lea.sflag [#allocation8], 1
    %23 = vsyncpa %s22, 0
    %24 = vsyncpa [#allocation11], 0
    %25 = vsyncpa [#allocation14], 0
    %26 = vsyncpa [#allocation6], 0
    %s27 = scalar_lea.sflag [#allocation6], 1
    %28 = vsyncpa %s27, 0
    %29 = vsyncpa [#allocation18], 0
    %s30 = scalar_lea.sflag [#allocation18], 1
    %31 = vsyncpa %s30, 0
    loop: start=0, step=1, limit=4
    $region2: #{tpu_custom_call.1} parent=1 // loop_pre_header
      _
    $region3: #{tpu_custom_call.1} parent=1 // loop_header
      %s33 = sphi 0, %s37
      %p34 = scmp.ge.s32.totalorder %s33, 4
      %s40 = sphi 0, %s59
      %s41 = sphi 0, %s55
      %s42 = sphi 0, %s51
      %s43 = sphi 0, %s40
      %s44 = sphi 0, %s41
      %s45 = sphi 0, %s42
      %s46 = sphi 0, %s43
      %s47 = sphi 0, %s44
      %s48 = sphi 0, %s45
      %s64 = sphi 0, %s66
      %s67 = sphi 0, %s64
      %s68 = sphi 0, %s67
      %s84 = sphi 0, %s68
      %s90 = sphi 0, %s92
      %s93 = sphi 0, %s90
      %s94 = sphi 0, %s93
      %s110 = sphi 0, %s94
      %s116 = sphi 0, %s118
      %s119 = sphi 0, %s116
      %s120 = sphi 0, %s119
      %s136 = sphi 0, %s120
      %s140 = sphi 0, %s140
      %s142 = sphi 0, %s140
      %s143 = sphi 0, %s142
      %s157 = sphi 0, %s143
      %s161 = sphi 0, %s161
      %s163 = sphi 0, %s161
      %s164 = sphi 0, %s163
      %s178 = sphi 0, %s164
      %s182 = sphi 0, %s182
      %s184 = sphi 0, %s182
      %s185 = sphi 0, %s184
      %s199 = sphi 0, %s185
      %s203 = sphi 0, %s203
      %s205 = sphi 0, %s203
      %s206 = sphi 0, %s205
      %s220 = sphi 0, %s206
      %s224 = sphi 0, %s224
      %s226 = sphi 0, %s224
      %s227 = sphi 0, %s226
      %s241 = sphi 0, %s227
      %s245 = sphi 0, %s245
      %s247 = sphi 0, %s245
      %s248 = sphi 0, %s247
      %s262 = sphi 0, %s248
      %s266 = sphi 0, %s266
      %s268 = sphi 0, %s266
      %s269 = sphi 0, %s268
      %s283 = sphi 0, %s269
      %s287 = sphi 0, %s287
      %s289 = sphi 0, %s287
      %s290 = sphi 0, %s289
      %s304 = sphi 0, %s290
      %s312 = sphi 0, %s314
      %s315 = sphi 0, %s312
      %s316 = sphi 0, %s315
      %s332 = sphi 0, %s316
      %s342 = sphi 0, %s344
      %s345 = sphi 0, %s342
      %s346 = sphi 0, %s345
      %s362 = sphi 0, %s346
    $region4: #{tpu_custom_call.1} parent=1 // loop_header_branch
      %36 = sbr.rel (%p34) target = $region8
    $region5: #{tpu_custom_call.1} parent=1 // loop_body
      %s38 = ssub.s32 %s33, 1
      %s39 = ssub.s32 %s33, 2
      %s49 = sadd.s32 1, %s42
      %p50 = scmp.ge.s32.totalorder %s49, 1
      %s51 = scalar_select %p50, 0, %s49
      %s52 = sadd.s32 1, %s41
      %s53 = scalar_select %p50, %s52, %s41
      %p54 = scmp.ge.s32.totalorder %s53, 1
      %s55 = scalar_select %p54, 0, %s53
      %s56 = sadd.s32 1, %s40
      %s57 = scalar_select %p54, %s56, %s40
      %p58 = scmp.ge.s32.totalorder %s57, 2
      %s59 = scalar_select %p58, 0, %s57
      %s60 = ssub.s32 %s40, %s59
      %s61 = ssub.s32 %s41, %s55
      %s62 = sor.u32 %s60, %s61
      %p63 = scmp.eq.s32.totalorder %s62, 0
      %s65 = sadd.s32 %s64, 1
      %s66 = scalar_select %p63, %s64, %s65
      %p69 = pneg %p63
      %p70 = scmp.eq.s32.totalorder %s33, 1
      %p71 = por %p69, %p70
      %p72 = scmp.ne.s32.totalorder %s64, %s67
      %p73 = scmp.eq.s32.totalorder %s33, 0
      %p74 = por %p72, %p73
      %p75 = scmp.ne.s32.totalorder %s64, %s67
      %p76 = scmp.eq.s32.totalorder %s38, 1
      %p77 = por %p75, %p76
      %p78 = scmp.ne.s32.totalorder %s67, %s68
      %p79 = scmp.eq.s32.totalorder %s38, 0
      %p80 = por %p78, %p79
      %p81 = scmp.ne.s32.totalorder %s67, %s68
      %p82 = scmp.eq.s32.totalorder %s39, 1
      %p83 = por %p81, %p82
      %p85 = scmp.ne.s32.totalorder %s68, %s84
      %p86 = scmp.eq.s32.totalorder %s39, 0
      %p87 = por %p85, %p86
      %s88 = ssub.s32 %s40, %s59
      %p89 = scmp.eq.s32.totalorder %s88, 0
      %s91 = sadd.s32 %s90, 1
      %s92 = scalar_select %p89, %s90, %s91
      %p95 = pneg %p89
      %p96 = scmp.eq.s32.totalorder %s33, 1
      %p97 = por %p95, %p96
      %p98 = scmp.ne.s32.totalorder %s90, %s93
      %p99 = scmp.eq.s32.totalorder %s33, 0
      %p100 = por %p98, %p99
      %p101 = scmp.ne.s32.totalorder %s90, %s93
      %p102 = scmp.eq.s32.totalorder %s38, 1
      %p103 = por %p101, %p102
      %p104 = scmp.ne.s32.totalorder %s93, %s94
      %p105 = scmp.eq.s32.totalorder %s38, 0
      %p106 = por %p104, %p105
      %p107 = scmp.ne.s32.totalorder %s93, %s94
      %p108 = scmp.eq.s32.totalorder %s39, 1
      %p109 = por %p107, %p108
      %p111 = scmp.ne.s32.totalorder %s94, %s110
      %p112 = scmp.eq.s32.totalorder %s39, 0
      %p113 = por %p111, %p112
      %s114 = ssub.s32 %s40, %s59
      %p115 = scmp.eq.s32.totalorder %s114, 0
      %s117 = sadd.s32 %s116, 1
      %s118 = scalar_select %p115, %s116, %s117
      %p121 = pneg %p115
      %p122 = scmp.eq.s32.totalorder %s33, 1
      %p123 = por %p121, %p122
      %p124 = scmp.ne.s32.totalorder %s116, %s119
      %p125 = scmp.eq.s32.totalorder %s33, 0
      %p126 = por %p124, %p125
      %p127 = scmp.ne.s32.totalorder %s116, %s119
      %p128 = scmp.eq.s32.totalorder %s38, 1
      %p129 = por %p127, %p128
      %p130 = scmp.ne.s32.totalorder %s119, %s120
      %p131 = scmp.eq.s32.totalorder %s38, 0
      %p132 = por %p130, %p131
      %p133 = scmp.ne.s32.totalorder %s119, %s120
      %p134 = scmp.eq.s32.totalorder %s39, 1
      %p135 = por %p133, %p134
      %p137 = scmp.ne.s32.totalorder %s120, %s136
      %p138 = scmp.eq.s32.totalorder %s39, 0
      %p139 = por %p137, %p138
      %s141 = sadd.s32 %s140, 1
      %p144 = scmp.eq.s32.totalorder %s33, 1
      %p145 = scmp.ne.s32.totalorder %s140, %s142
      %p146 = scmp.eq.s32.totalorder %s33, 0
      %p147 = por %p145, %p146
      %p148 = scmp.ne.s32.totalorder %s140, %s142
      %p149 = scmp.eq.s32.totalorder %s38, 1
      %p150 = por %p148, %p149
      %p151 = scmp.ne.s32.totalorder %s142, %s143
      %p152 = scmp.eq.s32.totalorder %s38, 0
      %p153 = por %p151, %p152
      %p154 = scmp.ne.s32.totalorder %s142, %s143
      %p155 = scmp.eq.s32.totalorder %s39, 1
      %p156 = por %p154, %p155
      %p158 = scmp.ne.s32.totalorder %s143, %s157
      %p159 = scmp.eq.s32.totalorder %s39, 0
      %p160 = por %p158, %p159
      %s162 = sadd.s32 %s161, 1
      %p165 = scmp.eq.s32.totalorder %s33, 1
      %p166 = scmp.ne.s32.totalorder %s161, %s163
      %p167 = scmp.eq.s32.totalorder %s33, 0
      %p168 = por %p166, %p167
      %p169 = scmp.ne.s32.totalorder %s161, %s163
      %p170 = scmp.eq.s32.totalorder %s38, 1
      %p171 = por %p169, %p170
      %p172 = scmp.ne.s32.totalorder %s163, %s164
      %p173 = scmp.eq.s32.totalorder %s38, 0
      %p174 = por %p172, %p173
      %p175 = scmp.ne.s32.totalorder %s163, %s164
      %p176 = scmp.eq.s32.totalorder %s39, 1
      %p177 = por %p175, %p176
      %p179 = scmp.ne.s32.totalorder %s164, %s178
      %p180 = scmp.eq.s32.totalorder %s39, 0
      %p181 = por %p179, %p180
      %s183 = sadd.s32 %s182, 1
      %p186 = scmp.eq.s32.totalorder %s33, 1
      %p187 = scmp.ne.s32.totalorder %s182, %s184
      %p188 = scmp.eq.s32.totalorder %s33, 0
      %p189 = por %p187, %p188
      %p190 = scmp.ne.s32.totalorder %s182, %s184
      %p191 = scmp.eq.s32.totalorder %s38, 1
      %p192 = por %p190, %p191
      %p193 = scmp.ne.s32.totalorder %s184, %s185
      %p194 = scmp.eq.s32.totalorder %s38, 0
      %p195 = por %p193, %p194
      %p196 = scmp.ne.s32.totalorder %s184, %s185
      %p197 = scmp.eq.s32.totalorder %s39, 1
      %p198 = por %p196, %p197
      %p200 = scmp.ne.s32.totalorder %s185, %s199
      %p201 = scmp.eq.s32.totalorder %s39, 0
      %p202 = por %p200, %p201
      %s204 = sadd.s32 %s203, 1
      %p207 = scmp.eq.s32.totalorder %s33, 1
      %p208 = scmp.ne.s32.totalorder %s203, %s205
      %p209 = scmp.eq.s32.totalorder %s33, 0
      %p210 = por %p208, %p209
      %p211 = scmp.ne.s32.totalorder %s203, %s205
      %p212 = scmp.eq.s32.totalorder %s38, 1
      %p213 = por %p211, %p212
      %p214 = scmp.ne.s32.totalorder %s205, %s206
      %p215 = scmp.eq.s32.totalorder %s38, 0
      %p216 = por %p214, %p215
      %p217 = scmp.ne.s32.totalorder %s205, %s206
      %p218 = scmp.eq.s32.totalorder %s39, 1
      %p219 = por %p217, %p218
      %p221 = scmp.ne.s32.totalorder %s206, %s220
      %p222 = scmp.eq.s32.totalorder %s39, 0
      %p223 = por %p221, %p222
      %s225 = sadd.s32 %s224, 1
      %p228 = scmp.eq.s32.totalorder %s33, 1
      %p229 = scmp.ne.s32.totalorder %s224, %s226
      %p230 = scmp.eq.s32.totalorder %s33, 0
      %p231 = por %p229, %p230
      %p232 = scmp.ne.s32.totalorder %s224, %s226
      %p233 = scmp.eq.s32.totalorder %s38, 1
      %p234 = por %p232, %p233
      %p235 = scmp.ne.s32.totalorder %s226, %s227
      %p236 = scmp.eq.s32.totalorder %s38, 0
      %p237 = por %p235, %p236
      %p238 = scmp.ne.s32.totalorder %s226, %s227
      %p239 = scmp.eq.s32.totalorder %s39, 1
      %p240 = por %p238, %p239
      %p242 = scmp.ne.s32.totalorder %s227, %s241
      %p243 = scmp.eq.s32.totalorder %s39, 0
      %p244 = por %p242, %p243
      %s246 = sadd.s32 %s245, 1
      %p249 = scmp.eq.s32.totalorder %s33, 1
      %p250 = scmp.ne.s32.totalorder %s245, %s247
      %p251 = scmp.eq.s32.totalorder %s33, 0
      %p252 = por %p250, %p251
      %p253 = scmp.ne.s32.totalorder %s245, %s247
      %p254 = scmp.eq.s32.totalorder %s38, 1
      %p255 = por %p253, %p254
      %p256 = scmp.ne.s32.totalorder %s247, %s248
      %p257 = scmp.eq.s32.totalorder %s38, 0
      %p258 = por %p256, %p257
      %p259 = scmp.ne.s32.totalorder %s247, %s248
      %p260 = scmp.eq.s32.totalorder %s39, 1
      %p261 = por %p259, %p260
      %p263 = scmp.ne.s32.totalorder %s248, %s262
      %p264 = scmp.eq.s32.totalorder %s39, 0
      %p265 = por %p263, %p264
      %s267 = sadd.s32 %s266, 1
      %p270 = scmp.eq.s32.totalorder %s33, 1
      %p271 = scmp.ne.s32.totalorder %s266, %s268
      %p272 = scmp.eq.s32.totalorder %s33, 0
      %p273 = por %p271, %p272
      %p274 = scmp.ne.s32.totalorder %s266, %s268
      %p275 = scmp.eq.s32.totalorder %s38, 1
      %p276 = por %p274, %p275
      %p277 = scmp.ne.s32.totalorder %s268, %s269
      %p278 = scmp.eq.s32.totalorder %s38, 0
      %p279 = por %p277, %p278
      %p280 = scmp.ne.s32.totalorder %s268, %s269
      %p281 = scmp.eq.s32.totalorder %s39, 1
      %p282 = por %p280, %p281
      %p284 = scmp.ne.s32.totalorder %s269, %s283
      %p285 = scmp.eq.s32.totalorder %s39, 0
      %p286 = por %p284, %p285
      %s288 = sadd.s32 %s287, 1
      %p291 = scmp.eq.s32.totalorder %s33, 1
      %p292 = scmp.ne.s32.totalorder %s287, %s289
      %p293 = scmp.eq.s32.totalorder %s33, 0
      %p294 = por %p292, %p293
      %p295 = scmp.ne.s32.totalorder %s287, %s289
      %p296 = scmp.eq.s32.totalorder %s38, 1
      %p297 = por %p295, %p296
      %p298 = scmp.ne.s32.totalorder %s289, %s290
      %p299 = scmp.eq.s32.totalorder %s38, 0
      %p300 = por %p298, %p299
      %p301 = scmp.ne.s32.totalorder %s289, %s290
      %p302 = scmp.eq.s32.totalorder %s39, 1
      %p303 = por %p301, %p302
      %p305 = scmp.ne.s32.totalorder %s290, %s304
      %p306 = scmp.eq.s32.totalorder %s39, 0
      %p307 = por %p305, %p306
      %s308 = ssub.s32 %s40, %s59
      %s309 = ssub.s32 %s41, %s55
      %s310 = sor.u32 %s308, %s309
      %p311 = scmp.eq.s32.totalorder %s310, 0
      %s313 = sadd.s32 %s312, 1
      %s314 = scalar_select %p311, %s312, %s313
      %p317 = pneg %p311
      %p318 = scmp.eq.s32.totalorder %s33, 1
      %p319 = por %p317, %p318
      %p320 = scmp.ne.s32.totalorder %s312, %s315
      %p321 = scmp.eq.s32.totalorder %s33, 0
      %p322 = por %p320, %p321
      %p323 = scmp.ne.s32.totalorder %s312, %s315
      %p324 = scmp.eq.s32.totalorder %s38, 1
      %p325 = por %p323, %p324
      %p326 = scmp.ne.s32.totalorder %s315, %s316
      %p327 = scmp.eq.s32.totalorder %s38, 0
      %p328 = por %p326, %p327
      %p329 = scmp.ne.s32.totalorder %s315, %s316
      %p330 = scmp.eq.s32.totalorder %s39, 1
      %p331 = por %p329, %p330
      %p333 = scmp.ne.s32.totalorder %s316, %s332
      %p334 = scmp.eq.s32.totalorder %s39, 0
      %p335 = por %p333, %p334
      %s336 = ssub.s32 %s40, %s59
      %s337 = ssub.s32 %s42, %s51
      %s338 = sor.u32 %s336, %s337
      %s339 = ssub.s32 %s41, %s55
      %s340 = sor.u32 %s338, %s339
      %p341 = scmp.eq.s32.totalorder %s340, 0
      %s343 = sadd.s32 %s342, 1
      %s344 = scalar_select %p341, %s342, %s343
      %p347 = pneg %p341
      %p348 = scmp.eq.s32.totalorder %s33, 1
      %p349 = por %p347, %p348
      %p350 = scmp.ne.s32.totalorder %s342, %s345
      %p351 = scmp.eq.s32.totalorder %s33, 0
      %p352 = por %p350, %p351
      %p353 = scmp.ne.s32.totalorder %s342, %s345
      %p354 = scmp.eq.s32.totalorder %s38, 1
      %p355 = por %p353, %p354
      %p356 = scmp.ne.s32.totalorder %s345, %s346
      %p357 = scmp.eq.s32.totalorder %s38, 0
      %p358 = por %p356, %p357
      %p359 = scmp.ne.s32.totalorder %s345, %s346
      %p360 = scmp.eq.s32.totalorder %s39, 1
      %p361 = por %p359, %p360
      %p363 = scmp.ne.s32.totalorder %s346, %s362
      %p364 = scmp.eq.s32.totalorder %s39, 0
      %p365 = por %p363, %p364
      %p366 = scmp.le.s32.totalorder 1, %s33
      %p367 = scmp.lt.s32.totalorder %s33, 3
      %p368 = pnand %p366, %p367
      %p369 = pneg %p368
      // Predicated region
      $region9: #{tpu_custom_call.1} parent=5 // pred_check
        _
      $region10: #{tpu_custom_call.1} parent=5 // pred_check_branch
        %371 = sbr.rel (%p368) target = $region12
      $region11: #{tpu_custom_call.1} parent=5 // pred_region
        %s372 = ssub.s32 %s33, 1
        // Predicated region
        $region13: #{tpu_custom_call.1} parent=11 // pred_check
          %p373 = pneg %p153
        $region14: #{tpu_custom_call.1} parent=11 // pred_check_branch
          %375 = sbr.rel (%p373) target = $region16
        $region15: #{tpu_custom_call.1} parent=11 // pred_region
          %377 = vsyncadd [#allocation11], 0
          %s378 = sshll.u32 %s3, 4
          %s379 = int_to_ptr.hbm [resolvable:$true] %s378
          %s380 = sshll.u32 [#allocation10], 4
          %s381 = int_to_ptr.vmem [resolvable:$true] %s380
          %386 = dma.hbm_to_vmem [thread:$0]  %s379, 256, %s381, [#allocation11], 64, 64, 4
        $region16: #{tpu_custom_call.1} parent=11 // pred_fallthru
          _
        // Predicated region
        $region17: #{tpu_custom_call.1} parent=11 // pred_check
          %p387 = pneg %p174
        $region18: #{tpu_custom_call.1} parent=11 // pred_check_branch
          %389 = sbr.rel (%p387) target = $region20
        $region19: #{tpu_custom_call.1} parent=11 // pred_region
          _
        $region20: #{tpu_custom_call.1} parent=11 // pred_fallthru
          _
        // Predicated region
        $region21: #{tpu_custom_call.1} parent=11 // pred_check
          %p390 = pneg %p195
        $region22: #{tpu_custom_call.1} parent=11 // pred_check_branch
          %392 = sbr.rel (%p390) target = $region24
        $region23: #{tpu_custom_call.1} parent=11 // pred_region
          %394 = vsyncadd [#allocation11], 0
          %s395 = sshll.u32 %s5, 4
          %s396 = int_to_ptr.hbm [resolvable:$true] %s395
          %s397 = sshll.u32 [#allocation12], 4
          %s398 = int_to_ptr.vmem [resolvable:$true] %s397
          %403 = dma.hbm_to_vmem [thread:$0]  %s396, 256, %s398, [#allocation11], 64, 64, 4
        $region24: #{tpu_custom_call.1} parent=11 // pred_fallthru
          _
        // Predicated region
        $region25: #{tpu_custom_call.1} parent=11 // pred_check
          %p404 = pneg %p216
        $region26: #{tpu_custom_call.1} parent=11 // pred_check_branch
          %406 = sbr.rel (%p404) target = $region28
        $region27: #{tpu_custom_call.1} parent=11 // pred_region
          _
        $region28: #{tpu_custom_call.1} parent=11 // pred_fallthru
          _
        // Predicated region
        $region29: #{tpu_custom_call.1} parent=11 // pred_check
          %p407 = pneg %p237
        $region30: #{tpu_custom_call.1} parent=11 // pred_check_branch
          %409 = sbr.rel (%p407) target = $region32
        $region31: #{tpu_custom_call.1} parent=11 // pred_region
          %411 = vsyncadd [#allocation14], 0
          %s412 = sshll.u32 %s7, 4
          %s413 = int_to_ptr.hbm [resolvable:$true] %s412
          %s414 = sshll.u32 [#allocation13], 4
          %s415 = int_to_ptr.vmem [resolvable:$true] %s414
          %420 = dma.hbm_to_vmem [thread:$0]  %s413, 256, %s415, [#allocation14], 64, 64, 4
        $region32: #{tpu_custom_call.1} parent=11 // pred_fallthru
          _
        // Predicated region
        $region33: #{tpu_custom_call.1} parent=11 // pred_check
          %p421 = pneg %p258
        $region34: #{tpu_custom_call.1} parent=11 // pred_check_branch
          %423 = sbr.rel (%p421) target = $region36
        $region35: #{tpu_custom_call.1} parent=11 // pred_region
          _
        $region36: #{tpu_custom_call.1} parent=11 // pred_fallthru
          _
        // Predicated region
        $region37: #{tpu_custom_call.1} parent=11 // pred_check
          %p424 = pneg %p279
        $region38: #{tpu_custom_call.1} parent=11 // pred_check_branch
          %426 = sbr.rel (%p424) target = $region40
        $region39: #{tpu_custom_call.1} parent=11 // pred_region
          %428 = vsyncadd [#allocation14], 0
          %s429 = sshll.u32 %s9, 4
          %s430 = int_to_ptr.hbm [resolvable:$true] %s429
          %s431 = sshll.u32 [#allocation15], 4
          %s432 = int_to_ptr.vmem [resolvable:$true] %s431
          %437 = dma.hbm_to_vmem [thread:$0]  %s430, 256, %s432, [#allocation14], 64, 64, 4
        $region40: #{tpu_custom_call.1} parent=11 // pred_fallthru
          _
        // Predicated region
        $region41: #{tpu_custom_call.1} parent=11 // pred_check
          %p438 = pneg %p300
        $region42: #{tpu_custom_call.1} parent=11 // pred_check_branch
          %440 = sbr.rel (%p438) target = $region44
        $region43: #{tpu_custom_call.1} parent=11 // pred_region
          _
        $region44: #{tpu_custom_call.1} parent=11 // pred_fallthru
          _
      $region12: #{tpu_custom_call.1} parent=5 // pred_fallthru
        _
      %p441 = scmp.lt.s32.totalorder %s33, 2
      // Predicated region
      $region45: #{tpu_custom_call.1} parent=5 // pred_check
        %p442 = pneg %p441
      $region46: #{tpu_custom_call.1} parent=5 // pred_check_branch
        %444 = sbr.rel (%p442) target = $region48
      $region47: #{tpu_custom_call.1} parent=5 // pred_region
        // Predicated region
        $region49: #{tpu_custom_call.1} parent=47 // pred_check
          %p445 = pneg %p74
        $region50: #{tpu_custom_call.1} parent=47 // pred_check_branch
          %447 = sbr.rel (%p445) target = $region52
        $region51: #{tpu_custom_call.1} parent=47 // pred_region
          %s448 = sand.u32 %s64, 1
          %s449 = scalar_lea.sflag [#allocation5], %s448
          %s450 = sand.u32 %s64, 1
          %s451 = smul.addr %s450, 4
          %s452 = scalar_lea.vmem [#allocation4], %s451
          %454 = vsyncadd %s449, 0
          %s455 = sadd.s32 %s41, %s40
          %s456 = smul.addr %s455, 4
          %s457 = scalar_lea.hbm %s0, %s456
          %s459 = sshll.u32 %s457, 4
          %s460 = int_to_ptr.hbm [resolvable:$true] %s459
          %s461 = sshll.u32 %s452, 4
          %s462 = int_to_ptr.vmem [resolvable:$true] %s461
          %464 = dma.hbm_to_vmem [thread:$0]  %s460, 64, %s462, %s449
        $region52: #{tpu_custom_call.1} parent=47 // pred_fallthru
          _
        // Predicated region
        $region53: #{tpu_custom_call.1} parent=47 // pred_check
          %p465 = pneg %p100
        $region54: #{tpu_custom_call.1} parent=47 // pred_check_branch
          %467 = sbr.rel (%p465) target = $region56
        $region55: #{tpu_custom_call.1} parent=47 // pred_region
          %s468 = sand.u32 %s33, 1
          %s469 = scalar_lea.sflag [#allocation8], %s468
          %s470 = sand.u32 %s90, 1
          %s471 = smul.addr %s470, 4
          %s472 = scalar_lea.vmem [#allocation7], %s471
          %474 = vsyncadd %s469, 0
          %s475 = smul.addr %s40, 4
          %s476 = scalar_lea.hbm %s1, %s475
          %s478 = sshll.u32 %s476, 4
          %s479 = int_to_ptr.hbm [resolvable:$true] %s478
          %s480 = sshll.u32 %s472, 4
          %s481 = int_to_ptr.vmem [resolvable:$true] %s480
          %483 = dma.hbm_to_vmem [thread:$0]  %s479, 64, %s481, %s469
        $region56: #{tpu_custom_call.1} parent=47 // pred_fallthru
          _
        // Predicated region
        $region57: #{tpu_custom_call.1} parent=47 // pred_check
          %p484 = pneg %p126
        $region58: #{tpu_custom_call.1} parent=47 // pred_check_branch
          %486 = sbr.rel (%p484) target = $region60
        $region59: #{tpu_custom_call.1} parent=47 // pred_region
          %s487 = sand.u32 %s33, 1
          %s488 = scalar_lea.sflag [#allocation8], %s487
          %s489 = sand.u32 %s116, 1
          %s490 = smul.addr %s489, 4
          %s491 = scalar_lea.vmem [#allocation9], %s490
          %493 = vsyncadd %s488, 0
          %s494 = smul.addr %s40, 4
          %s495 = scalar_lea.hbm %s2, %s494
          %s497 = sshll.u32 %s495, 4
          %s498 = int_to_ptr.hbm [resolvable:$true] %s497
          %s499 = sshll.u32 %s491, 4
          %s500 = int_to_ptr.vmem [resolvable:$true] %s499
          %502 = dma.hbm_to_vmem [thread:$0]  %s498, 64, %s500, %s488
        $region60: #{tpu_custom_call.1} parent=47 // pred_fallthru
          _
      $region48: #{tpu_custom_call.1} parent=5 // pred_fallthru
        _
      %p503 = scmp.le.s32.totalorder 1, %s33
      %p504 = scmp.lt.s32.totalorder %s33, 3
      %p505 = pnand %p503, %p504
      %p506 = pneg %p505
      // Predicated region
      $region61: #{tpu_custom_call.1} parent=5 // pred_check
        _
      $region62: #{tpu_custom_call.1} parent=5 // pred_check_branch
        %508 = sbr.rel (%p505) target = $region64
      $region63: #{tpu_custom_call.1} parent=5 // pred_region
        %s509 = ssub.s32 %s33, 1
        %s510 = sand.u32 %s67, 1
        %s511 = scalar_lea.sflag [#allocation5], %s510
        %s512 = sand.u32 %s67, 1
        %s513 = smul.addr %s512, 4
        %s514 = scalar_lea.vmem [#allocation4], %s513
        // Predicated region
        $region65: #{tpu_custom_call.1} parent=63 // pred_check
          %p515 = pneg %p80
        $region66: #{tpu_custom_call.1} parent=63 // pred_check_branch
          %517 = sbr.rel (%p515) target = $region68
        $region67: #{tpu_custom_call.1} parent=63 // pred_region
          %519 = dma.done %s511, 64
        $region68: #{tpu_custom_call.1} parent=63 // pred_fallthru
          _
        %s520 = sand.u32 %s38, 1
        %s521 = scalar_lea.sflag [#allocation8], %s520
        %s522 = sand.u32 %s93, 1
        %s523 = smul.addr %s522, 4
        %s524 = scalar_lea.vmem [#allocation7], %s523
        // Predicated region
        $region69: #{tpu_custom_call.1} parent=63 // pred_check
          %p525 = pneg %p106
        $region70: #{tpu_custom_call.1} parent=63 // pred_check_branch
          %527 = sbr.rel (%p525) target = $region72
        $region71: #{tpu_custom_call.1} parent=63 // pred_region
          %529 = dma.done %s521, 64
        $region72: #{tpu_custom_call.1} parent=63 // pred_fallthru
          _
        %s530 = sand.u32 %s38, 1
        %s531 = scalar_lea.sflag [#allocation8], %s530
        %s532 = sand.u32 %s119, 1
        %s533 = smul.addr %s532, 4
        %s534 = scalar_lea.vmem [#allocation9], %s533
        // Predicated region
        $region73: #{tpu_custom_call.1} parent=63 // pred_check
          %p535 = pneg %p132
        $region74: #{tpu_custom_call.1} parent=63 // pred_check_branch
          %537 = sbr.rel (%p535) target = $region76
        $region75: #{tpu_custom_call.1} parent=63 // pred_region
          %539 = dma.done %s531, 64
        $region76: #{tpu_custom_call.1} parent=63 // pred_fallthru
          _
        // Predicated region
        $region77: #{tpu_custom_call.1} parent=63 // pred_check
          %p540 = pneg %p153
        $region78: #{tpu_custom_call.1} parent=63 // pred_check_branch
          %542 = sbr.rel (%p540) target = $region80
        $region79: #{tpu_custom_call.1} parent=63 // pred_region
          %544 = dma.done [#allocation11], 256
        $region80: #{tpu_custom_call.1} parent=63 // pred_fallthru
          _
        // Predicated region
        $region81: #{tpu_custom_call.1} parent=63 // pred_check
          %p545 = pneg %p195
        $region82: #{tpu_custom_call.1} parent=63 // pred_check_branch
          %547 = sbr.rel (%p545) target = $region84
        $region83: #{tpu_custom_call.1} parent=63 // pred_region
          %549 = dma.done [#allocation11], 256
        $region84: #{tpu_custom_call.1} parent=63 // pred_fallthru
          _
        // Predicated region
        $region85: #{tpu_custom_call.1} parent=63 // pred_check
          %p550 = pneg %p237
        $region86: #{tpu_custom_call.1} parent=63 // pred_check_branch
          %552 = sbr.rel (%p550) target = $region88
        $region87: #{tpu_custom_call.1} parent=63 // pred_region
          %554 = dma.done [#allocation14], 256
        $region88: #{tpu_custom_call.1} parent=63 // pred_fallthru
          _
        // Predicated region
        $region89: #{tpu_custom_call.1} parent=63 // pred_check
          %p555 = pneg %p279
        $region90: #{tpu_custom_call.1} parent=63 // pred_check_branch
          %557 = sbr.rel (%p555) target = $region92
        $region91: #{tpu_custom_call.1} parent=63 // pred_region
          %559 = dma.done [#allocation14], 256
        $region92: #{tpu_custom_call.1} parent=63 // pred_fallthru
          _
        %s560 = sand.u32 %s67, 1
        %s561 = scalar_lea.sflag [#allocation5], %s560
        %s562 = sand.u32 %s67, 1
        %s563 = smul.addr %s562, 4
        %s564 = scalar_lea.vmem [#allocation4], %s563
        %p565 = pneg %p80
        %p566 = pneg %p77
        %s567 = sand.u32 %s38, 1
        %s568 = scalar_lea.sflag [#allocation8], %s567
        %s569 = sand.u32 %s93, 1
        %s570 = smul.addr %s569, 4
        %s571 = scalar_lea.vmem [#allocation7], %s570
        %p572 = pneg %p106
        %p573 = pneg %p103
        %s574 = sand.u32 %s38, 1
        %s575 = scalar_lea.sflag [#allocation8], %s574
        %s576 = sand.u32 %s119, 1
        %s577 = smul.addr %s576, 4
        %s578 = scalar_lea.vmem [#allocation9], %s577
        %p579 = pneg %p132
        %p580 = pneg %p129
        %p581 = pneg %p153
        %p582 = pneg %p150
        %p583 = pneg %p174
        %p584 = pneg %p171
        %p585 = pneg %p195
        %p586 = pneg %p192
        %p587 = pneg %p216
        %p588 = pneg %p213
        %p589 = pneg %p237
        %p590 = pneg %p234
        %p591 = pneg %p258
        %p592 = pneg %p255
        %p593 = pneg %p279
        %p594 = pneg %p276
        %p595 = pneg %p300
        %p596 = pneg %p297
        %p597 = pneg %p328
        %p598 = pneg %p325
        %s599 = sand.u32 %s315, 1
        %s600 = scalar_lea.sflag [#allocation6], %s599
        %s601 = sand.u32 %s315, 1
        %s602 = smul.addr %s601, 8
        %s603 = scalar_lea.vmem [#allocation16], %s602
        %p604 = pneg %p358
        %p605 = pneg %p355
        %s606 = sand.u32 %s345, 1
        %s607 = scalar_lea.sflag [#allocation18], %s606
        %s608 = sand.u32 %s345, 1
        %s609 = smul.addr %s608, 32
        %s610 = scalar_lea.vmem [#allocation17], %s609
        %s611 = smul.u32 4, %s45
        %p613 = scmp.eq.s32.totalorder %s44, 0
        // Predicated region
        $region93: #{tpu_custom_call.1} parent=63 // pred_check
          %p614 = pneg %p613
        $region94: #{tpu_custom_call.1} parent=63 // pred_check_branch
          %616 = sbr.rel (%p614) target = $region96
        $region95: #{tpu_custom_call.1} parent=63 // pred_region
          %v617 = vld [vmem:[%s524] sm:$0xf]
          %v618 = vld [vmem:[%s534] sm:$0xf]
          %s619 = smul.u32 %s45, 4
          %s620 = smul.addr %s619, 4
          %s621 = scalar_lea.vmem [#allocation12], %s620
          %v622 = vld [vmem:[%s621] sm:$0xf]
          %v623 = vld [vmem:[%s621 + $0x4] sm:$0xf]
          %v624 = vld [vmem:[%s621 + $0x8] sm:$0xf]
          %v625 = vld [vmem:[%s621 + $0xc] sm:$0xf]
          %s626 = scalar_lea.vmem %s6, %s45
          %v627 = vld [vmem:[%s626] sm:$0x1]
          %v629 = vperm.slane %v627, 0
          %v635 = vunpack.c.l.b16 %v622
          %v636 = vunpack.c.l.b16 %v623
          %v637 = vunpack.c.l.b16 %v624
          %v638 = vunpack.c.l.b16 %v625
          %v639 = vpack.c.b16 %v636, %v635
          %v640 = vpack.c.b16 %v638, %v637
          %vm643 = vcmask 261120
          %v645 = vsel %vm643, %v617, 0
          %647 = vmatpush.bf16.msra.mxu0 0
          %648 = vmatpush.bf16.msra.mxu0 0
          %649 = vmatpush.bf16.msra.mxu0 0
          %650 = vmatpush.bf16.msra.mxu0 0
          %651 = vmatpush.bf16.msra.mxu0 0
          %652 = vmatpush.bf16.msra.mxu0 0
          %653 = vmatpush.bf16.msra.mxu0 %v640
          %654 = vmatpush.bf16.msra.mxu0 %v639
          %655 = vmatmul.bf16.gmra.mxu0 %v645
          %v656 = vpop.f32.mrf.mxu0
          %v657 = vadd.f32 %v629, %v656
          %v658 = vpop.f32.mrf.mxu0
          %659 = vdwg.mxu0
          %v660 = vpack.c.bf16 %v657, %v657
          %s661 = smul.addr %s619, 4
          %s662 = scalar_lea.vmem [#allocation13], %s661
          %v663 = vld [vmem:[%s662] sm:$0xf]
          %v664 = vld [vmem:[%s662 + $0x4] sm:$0xf]
          %v665 = vld [vmem:[%s662 + $0x8] sm:$0xf]
          %v666 = vld [vmem:[%s662 + $0xc] sm:$0xf]
          %s667 = scalar_lea.vmem %s8, %s45
          %v668 = vld [vmem:[%s667] sm:$0x1]
          %v670 = vperm.slane %v668, 0
          %v676 = vunpack.c.l.b16 %v663
          %v677 = vunpack.c.l.b16 %v664
          %v678 = vunpack.c.l.b16 %v665
          %v679 = vunpack.c.l.b16 %v666
          %v680 = vpack.c.b16 %v677, %v676
          %v681 = vpack.c.b16 %v679, %v678
          %v685 = vsel %vm643, %v618, 0
          %687 = vmatpush.bf16.msra.mxu0 0
          %688 = vmatpush.bf16.msra.mxu0 0
          %689 = vmatpush.bf16.msra.mxu0 0
          %690 = vmatpush.bf16.msra.mxu0 0
          %691 = vmatpush.bf16.msra.mxu0 0
          %692 = vmatpush.bf16.msra.mxu0 0
          %693 = vmatpush.bf16.msra.mxu0 %v681
          %694 = vmatpush.bf16.msra.mxu0 %v680
          %695 = vmatmul.bf16.gmra.mxu0 %v685
          %v696 = vpop.f32.mrf.mxu0
          %v697 = vadd.f32 %v670, %v696
          %v698 = vpop.f32.mrf.mxu0
          %699 = vdwg.mxu0
          %v700 = vpack.c.bf16 %v697, %v697
          %702 = vrot.lane.b32.xlu0 %v660, 120
          %v703 = vpop.permute.xlu0 %702
          %705 = vrot.lane.b32.xlu0 %v660, 112
          %v706 = vpop.permute.xlu0 %705
          %708 = vrot.lane.b32.xlu0 %v660, 104
          %v709 = vpop.permute.xlu0 %708
          %s711 = smul.addr %s619, 4
          %s712 = scalar_lea.vmem [#allocation2], %s711
          %vm713 = vcmask 60416
          %714 = vst.msk [vmem:[%s712] sm:$0xf] %vm713, %v660
          %715 = vst.msk [vmem:[%s712 + $0x4] sm:$0xf] %vm713, %v703
          %716 = vst.msk [vmem:[%s712 + $0x8] sm:$0xf] %vm713, %v706
          %717 = vst.msk [vmem:[%s712 + $0xc] sm:$0xf] %vm713, %v709
          %719 = vrot.lane.b32.xlu0 %v700, 120
          %v720 = vpop.permute.xlu0 %719
          %722 = vrot.lane.b32.xlu0 %v700, 112
          %v723 = vpop.permute.xlu0 %722
          %725 = vrot.lane.b32.xlu0 %v700, 104
          %v726 = vpop.permute.xlu0 %725
          %s728 = smul.addr %s619, 4
          %s729 = scalar_lea.vmem [#allocation3], %s728
          %730 = vst.msk [vmem:[%s729] sm:$0xf] %vm713, %v700
          %731 = vst.msk [vmem:[%s729 + $0x4] sm:$0xf] %vm713, %v720
          %732 = vst.msk [vmem:[%s729 + $0x8] sm:$0xf] %vm713, %v723
          %733 = vst.msk [vmem:[%s729 + $0xc] sm:$0xf] %vm713, %v726
        $region96: #{tpu_custom_call.1} parent=63 // pred_fallthru
          _
        %s734 = smul.u32 %s45, 4
        %s735 = smul.addr %s734, 4
        %s736 = scalar_lea.vmem [#allocation2], %s735
        %v737 = vld [vmem:[%s736] sm:$0xf]
        %v738 = vld [vmem:[%s736 + $0x4] sm:$0xf]
        %v739 = vld [vmem:[%s736 + $0x8] sm:$0xf]
        %v740 = vld [vmem:[%s736 + $0xc] sm:$0xf]
        %s741 = smul.addr %s734, 4
        %s742 = scalar_lea.vmem [#allocation3], %s741
        %v743 = vld [vmem:[%s742] sm:$0xf]
        %v744 = vld [vmem:[%s742 + $0x4] sm:$0xf]
        %v745 = vld [vmem:[%s742 + $0x8] sm:$0xf]
        %v746 = vld [vmem:[%s742 + $0xc] sm:$0xf]
        %v747 = vld [vmem:[%s514] sm:$0xf]
        %s748 = smul.addr %s734, 4
        %s749 = scalar_lea.vmem [#allocation10], %s748
        %v750 = vld [vmem:[%s749] sm:$0xf]
        %v751 = vld [vmem:[%s749 + $0x4] sm:$0xf]
        %v752 = vld [vmem:[%s749 + $0x8] sm:$0xf]
        %v753 = vld [vmem:[%s749 + $0xc] sm:$0xf]
        %s754 = scalar_lea.vmem %s4, %s45
        %v755 = vld [vmem:[%s754] sm:$0x1]
        %v757 = vperm.slane %v755, 0
        %v763 = vunpack.c.l.b16 %v750
        %v764 = vunpack.c.l.b16 %v751
        %v765 = vunpack.c.l.b16 %v752
        %v766 = vunpack.c.l.b16 %v753
        %v767 = vpack.c.b16 %v764, %v763
        %v768 = vpack.c.b16 %v766, %v765
        %vm771 = vcmask 261120
        %v773 = vsel %vm771, %v747, 0
        %775 = vmatpush.bf16.msra.mxu0 0
        %776 = vmatpush.bf16.msra.mxu0 0
        %777 = vmatpush.bf16.msra.mxu0 0
        %778 = vmatpush.bf16.msra.mxu0 0
        %779 = vmatpush.bf16.msra.mxu0 0
        %780 = vmatpush.bf16.msra.mxu0 0
        %781 = vmatpush.bf16.msra.mxu0 %v768
        %782 = vmatpush.bf16.msra.mxu0 %v767
        %783 = vmatmul.bf16.gmra.mxu0 %v773
        %v784 = vpop.f32.mrf.mxu0
        %v785 = vadd.f32 %v757, %v784
        %v786 = vpop.f32.mrf.mxu0
        %787 = vdwg.mxu0
        %v788 = vpack.c.bf16 %v785, %v785
        %790 = vrot.lane.b32.xlu0 %v788, 120
        %v791 = vpop.permute.xlu0 %790
        %792 = vrot.lane.b32.xlu0 %v788, 112
        %v793 = vpop.permute.xlu0 %792
        %794 = vrot.lane.b32.xlu0 %v788, 104
        %v795 = vpop.permute.xlu0 %794
        %vm796 = vcmask 64512
        %v798 = vsel %vm796, %v788, 0
        %v801 = vsel %vm796, %v737, 0
        %803 = vmatpush.bf16.xpose.msra.mxu0 0
        %804 = vmatpush.bf16.xpose.msra.mxu0 0
        %805 = vmatpush.bf16.xpose.msra.mxu0 0
        %806 = vmatpush.bf16.xpose.msra.mxu0 0
        %807 = vmatpush.bf16.xpose.msra.mxu0 0
        %808 = vmatpush.bf16.xpose.msra.mxu0 0
        %809 = vmatpush.bf16.xpose.msra.mxu0 0
        %810 = vmatpush.bf16.xpose.msra.mxu0 %v801
        %811 = vmatmul.bf16.gmra.mxu0 %v798
        %v812 = vpop.f32.mrf.mxu0
        %v813 = vadd.f32 0.0, %v812
        %v814 = vpop.f32.mrf.mxu0
        %815 = vdwg.mxu0
        %v817 = vsel %vm796, %v791, 0
        %v820 = vsel %vm796, %v738, 0
        %822 = vmatpush.bf16.xpose.msra.mxu0 0
        %823 = vmatpush.bf16.xpose.msra.mxu0 0
        %824 = vmatpush.bf16.xpose.msra.mxu0 0
        %825 = vmatpush.bf16.xpose.msra.mxu0 0
        %826 = vmatpush.bf16.xpose.msra.mxu0 0
        %827 = vmatpush.bf16.xpose.msra.mxu0 0
        %828 = vmatpush.bf16.xpose.msra.mxu0 0
        %829 = vmatpush.bf16.xpose.msra.mxu0 %v820
        %830 = vmatmul.bf16.gmra.mxu0 %v817
        %v831 = vpop.f32.mrf.mxu0
        %v832 = vadd.f32 0.0, %v831
        %v833 = vpop.f32.mrf.mxu0
        %834 = vdwg.mxu0
        %v836 = vsel %vm796, %v793, 0
        %v839 = vsel %vm796, %v739, 0
        %841 = vmatpush.bf16.xpose.msra.mxu0 0
        %842 = vmatpush.bf16.xpose.msra.mxu0 0
        %843 = vmatpush.bf16.xpose.msra.mxu0 0
        %844 = vmatpush.bf16.xpose.msra.mxu0 0
        %845 = vmatpush.bf16.xpose.msra.mxu0 0
        %846 = vmatpush.bf16.xpose.msra.mxu0 0
        %847 = vmatpush.bf16.xpose.msra.mxu0 0
        %848 = vmatpush.bf16.xpose.msra.mxu0 %v839
        %849 = vmatmul.bf16.gmra.mxu0 %v836
        %v850 = vpop.f32.mrf.mxu0
        %v851 = vadd.f32 0.0, %v850
        %v852 = vpop.f32.mrf.mxu0
        %853 = vdwg.mxu0
        %v855 = vsel %vm796, %v795, 0
        %v858 = vsel %vm796, %v740, 0
        %860 = vmatpush.bf16.xpose.msra.mxu0 0
        %861 = vmatpush.bf16.xpose.msra.mxu0 0
        %862 = vmatpush.bf16.xpose.msra.mxu0 0
        %863 = vmatpush.bf16.xpose.msra.mxu0 0
        %864 = vmatpush.bf16.xpose.msra.mxu0 0
        %865 = vmatpush.bf16.xpose.msra.mxu0 0
        %866 = vmatpush.bf16.xpose.msra.mxu0 0
        %867 = vmatpush.bf16.xpose.msra.mxu0 %v858
        %868 = vmatmul.bf16.gmra.mxu0 %v855
        %v869 = vpop.f32.mrf.mxu0
        %v870 = vadd.f32 0.0, %v869
        %v871 = vpop.f32.mrf.mxu0
        %872 = vdwg.mxu0
        %v873 = vsel %vm796, %v813, -inf
        %874 = vmax.xlane.f32.xlu0 %v873
        %v875 = vpop.xlane.xlu0 %874
        %v876 = vsel %vm796, %v832, -inf
        %877 = vmax.xlane.f32.xlu0 %v876
        %v878 = vpop.xlane.xlu0 %877
        %v879 = vsel %vm796, %v851, -inf
        %880 = vmax.xlane.f32.xlu0 %v879
        %v881 = vpop.xlane.xlu0 %880
        %v882 = vsel %vm796, %v870, -inf
        %883 = vmax.xlane.f32.xlu0 %v882
        %v884 = vpop.xlane.xlu0 %883
        %v885 = vsub.f32 %v813, %v875
        %v886 = vsub.f32 %v832, %v878
        %v887 = vsub.f32 %v851, %v881
        %v888 = vsub.f32 %v870, %v884
        %v889 = vmul.f32 %v885, 1.442695
        %v890 = vpow.pop %v889
        %v891 = vmul.f32 %v886, 1.442695
        %v892 = vpow.pop %v891
        %v893 = vmul.f32 %v887, 1.442695
        %v894 = vpow.pop %v893
        %v895 = vmul.f32 %v888, 1.442695
        %v896 = vpow.pop %v895
        %v897 = vsel %vm796, %v890, 0.0
        %898 = vadd.xlane.f32.xlu0 %v897
        %v899 = vpop.xlane.xlu0 %898
        %v900 = vsel %vm796, %v892, 0.0
        %901 = vadd.xlane.f32.xlu0 %v900
        %v902 = vpop.xlane.xlu0 %901
        %v903 = vsel %vm796, %v894, 0.0
        %904 = vadd.xlane.f32.xlu0 %v903
        %v905 = vpop.xlane.xlu0 %904
        %v906 = vsel %vm796, %v896, 0.0
        %907 = vadd.xlane.f32.xlu0 %v906
        %v908 = vpop.xlane.xlu0 %907
        %v909 = vrcp.pop %v899
        %v910 = vrcp.pop %v902
        %v911 = vrcp.pop %v905
        %v912 = vrcp.pop %v908
        %v913 = vmul.f32 %v890, %v909
        %v914 = vmul.f32 %v892, %v910
        %v915 = vmul.f32 %v894, %v911
        %v916 = vmul.f32 %v896, %v912
        %917 = vst.msk [vmem:[%s610] sm:$0xff] %vm796, %v913
        %918 = vst.msk [vmem:[%s610 + $0x8] sm:$0xff] %vm796, %v914
        %919 = vst.msk [vmem:[%s610 + $0x10] sm:$0xff] %vm796, %v915
        %920 = vst.msk [vmem:[%s610 + $0x18] sm:$0xff] %vm796, %v916
        %v921 = vpack.c.bf16 %v913, %v913
        %v922 = vpack.c.bf16 %v914, %v914
        %v923 = vpack.c.bf16 %v915, %v915
        %v924 = vpack.c.bf16 %v916, %v916
        %v926 = vsel %vm796, %v921, 0
        %vm928 = vcmask 1043456
        %v930 = vsel %vm928, %v743, 0
        %932 = vmatpush.bf16.msra.mxu0 0
        %933 = vmatpush.bf16.msra.mxu0 0
        %934 = vmatpush.bf16.msra.mxu0 0
        %935 = vmatpush.bf16.msra.mxu0 0
        %936 = vmatpush.bf16.msra.mxu0 0
        %937 = vmatpush.bf16.msra.mxu0 0
        %938 = vmatpush.bf16.msra.mxu0 0
        %939 = vmatpush.bf16.msra.mxu0 %v930
        %940 = vmatmul.bf16.gmra.mxu0 %v926
        %v941 = vpop.f32.mrf.mxu0
        %v942 = vadd.f32 0.0, %v941
        %v943 = vpop.f32.mrf.mxu0
        %944 = vdwg.mxu0
        %v946 = vsel %vm796, %v922, 0
        %v949 = vsel %vm928, %v744, 0
        %951 = vmatpush.bf16.msra.mxu0 0
        %952 = vmatpush.bf16.msra.mxu0 0
        %953 = vmatpush.bf16.msra.mxu0 0
        %954 = vmatpush.bf16.msra.mxu0 0
        %955 = vmatpush.bf16.msra.mxu0 0
        %956 = vmatpush.bf16.msra.mxu0 0
        %957 = vmatpush.bf16.msra.mxu0 0
        %958 = vmatpush.bf16.msra.mxu0 %v949
        %959 = vmatmul.bf16.gmra.mxu0 %v946
        %v960 = vpop.f32.mrf.mxu0
        %v961 = vadd.f32 0.0, %v960
        %v962 = vpop.f32.mrf.mxu0
        %963 = vdwg.mxu0
        %v965 = vsel %vm796, %v923, 0
        %v968 = vsel %vm928, %v745, 0
        %970 = vmatpush.bf16.msra.mxu0 0
        %971 = vmatpush.bf16.msra.mxu0 0
        %972 = vmatpush.bf16.msra.mxu0 0
        %973 = vmatpush.bf16.msra.mxu0 0
        %974 = vmatpush.bf16.msra.mxu0 0
        %975 = vmatpush.bf16.msra.mxu0 0
        %976 = vmatpush.bf16.msra.mxu0 0
        %977 = vmatpush.bf16.msra.mxu0 %v968
        %978 = vmatmul.bf16.gmra.mxu0 %v965
        %v979 = vpop.f32.mrf.mxu0
        %v980 = vadd.f32 0.0, %v979
        %v981 = vpop.f32.mrf.mxu0
        %982 = vdwg.mxu0
        %v984 = vsel %vm796, %v924, 0
        %v987 = vsel %vm928, %v746, 0
        %989 = vmatpush.bf16.msra.mxu0 0
        %990 = vmatpush.bf16.msra.mxu0 0
        %991 = vmatpush.bf16.msra.mxu0 0
        %992 = vmatpush.bf16.msra.mxu0 0
        %993 = vmatpush.bf16.msra.mxu0 0
        %994 = vmatpush.bf16.msra.mxu0 0
        %995 = vmatpush.bf16.msra.mxu0 0
        %996 = vmatpush.bf16.msra.mxu0 %v987
        %997 = vmatmul.bf16.gmra.mxu0 %v984
        %v998 = vpop.f32.mrf.mxu0
        %v999 = vadd.f32 0.0, %v998
        %v1000 = vpop.f32.mrf.mxu0
        %1001 = vdwg.mxu0
        %1003 = vrot.lane.b32.xlu0 %v961, 8
        %v1004 = vpop.permute.xlu0 %1003
        %1007 = vrot.lane.b32.xlu0 %v980, 16
        %v1008 = vpop.permute.xlu0 %1007
        %1011 = vrot.lane.b32.xlu0 %v999, 24
        %v1012 = vpop.permute.xlu0 %1011
        %v1014 = vsel %vm796, %v942, %v1004
        %vm1015 = vcmask 130048
        %v1016 = vsel %vm1015, %v1014, %v1008
        %vm1017 = vcmask 195584
        %v1018 = vsel %vm1017, %v1016, %v1012
        %v1019 = vpack.c.bf16 %v1018, %v1018
        %s1020 = smul.addr %s734, 4
        %s1021 = scalar_lea.vmem [#allocation15], %s1020
        %v1022 = vld [vmem:[%s1021] sm:$0xf]
        %v1023 = vld [vmem:[%s1021 + $0x4] sm:$0xf]
        %v1024 = vld [vmem:[%s1021 + $0x8] sm:$0xf]
        %v1025 = vld [vmem:[%s1021 + $0xc] sm:$0xf]
        %v1030 = vunpack.c.l.b16 %v1022
        %v1031 = vunpack.c.l.b16 %v1023
        %v1032 = vunpack.c.l.b16 %v1024
        %v1033 = vunpack.c.l.b16 %v1025
        %v1034 = vpack.c.b16 %v1031, %v1030
        %v1035 = vpack.c.b16 %v1033, %v1032
        %v1039 = vsel %vm771, %v1019, 0
        %1041 = vmatpush.bf16.msra.mxu0 0
        %1042 = vmatpush.bf16.msra.mxu0 0
        %1043 = vmatpush.bf16.msra.mxu0 0
        %1044 = vmatpush.bf16.msra.mxu0 0
        %1045 = vmatpush.bf16.msra.mxu0 0
        %1046 = vmatpush.bf16.msra.mxu0 0
        %1047 = vmatpush.bf16.msra.mxu0 %v1035
        %1048 = vmatpush.bf16.msra.mxu0 %v1034
        %1049 = vmatmul.bf16.gmra.mxu0 %v1039
        %v1050 = vpop.f32.mrf.mxu0
        %v1051 = vadd.f32 0.0, %v1050
        %v1052 = vpop.f32.mrf.mxu0
        %1053 = vdwg.mxu0
        %p1054 = scmp.eq.s32.totalorder %s45, 0
        // Predicated region
        $region97: #{tpu_custom_call.1} parent=63 // pred_check
          %p1055 = pneg %p1054
        $region98: #{tpu_custom_call.1} parent=63 // pred_check_branch
          %1057 = sbr.rel (%p1055) target = $region100
        $region99: #{tpu_custom_call.1} parent=63 // pred_region
          %v1058 = vld [vmem:[%s10] sm:$0x1]
          %v1060 = vperm.slane %v1058, 0
          %1062 = vst.msk [vmem:[%s603] sm:$0xff] %vm771, %v1060
        $region100: #{tpu_custom_call.1} parent=63 // pred_fallthru
          _
        %v1063 = vld [vmem:[%s603] sm:$0xff]
        %v1064 = vadd.f32 %v1063, %v1051
        %1065 = vst.msk [vmem:[%s603] sm:$0xff] %vm771, %v1064
        %s1066 = sand.u32 %s315, 1
        %s1067 = scalar_lea.sflag [#allocation6], %s1066
        %s1068 = sand.u32 %s315, 1
        %s1069 = smul.addr %s1068, 8
        %s1070 = scalar_lea.vmem [#allocation16], %s1069
        %s1071 = sand.u32 %s345, 1
        %s1072 = scalar_lea.sflag [#allocation18], %s1071
        %s1073 = sand.u32 %s345, 1
        %s1074 = smul.addr %s1073, 32
        %s1075 = scalar_lea.vmem [#allocation17], %s1074
        // Predicated region
        $region101: #{tpu_custom_call.1} parent=63 // pred_check
          %p1076 = pneg %p325
        $region102: #{tpu_custom_call.1} parent=63 // pred_check_branch
          %1078 = sbr.rel (%p1076) target = $region104
        $region103: #{tpu_custom_call.1} parent=63 // pred_region
          %1080 = vsyncadd %s1067, 0
          %s1081 = sadd.s32 %s44, %s43
          %s1082 = smul.addr %s1081, 8
          %s1083 = scalar_lea.hbm %s11, %s1082
          %s1085 = sshll.u32 %s1070, 4
          %s1086 = int_to_ptr.vmem [resolvable:$true] %s1085
          %s1087 = sshll.u32 %s1083, 4
          %s1088 = int_to_ptr.hbm [resolvable:$true] %s1087
          %1090 = dma.vmem_to_hbm [thread:$0]  %s1086, 128, %s1088, %s1067
        $region104: #{tpu_custom_call.1} parent=63 // pred_fallthru
          _
        // Predicated region
        $region105: #{tpu_custom_call.1} parent=63 // pred_check
          %p1091 = pneg %p355
        $region106: #{tpu_custom_call.1} parent=63 // pred_check_branch
          %1093 = sbr.rel (%p1091) target = $region108
        $region107: #{tpu_custom_call.1} parent=63 // pred_region
          %s1094 = smul.u32 4, %s45
          %1096 = vsyncadd %s1072, 0
          %s1097 = sadd.s32 %s44, %s1094
          %s1098 = smul.addr %s43, 4
          %s1099 = sadd.s32 %s1097, %s1098
          %s1100 = smul.addr %s1099, 8
          %s1101 = scalar_lea.hbm %s12, %s1100
          %s1102 = sshll.u32 %s1075, 4
          %s1103 = int_to_ptr.vmem [resolvable:$true] %s1102
          %s1104 = sshll.u32 %s1101, 4
          %s1105 = int_to_ptr.hbm [resolvable:$true] %s1104
          %1110 = dma.vmem_to_hbm [thread:$0]  %s1103, 512, %s1105, %s1072, 128, 128, 8
        $region108: #{tpu_custom_call.1} parent=63 // pred_fallthru
          _
      $region64: #{tpu_custom_call.1} parent=5 // pred_fallthru
        _
      %p1111 = scmp.le.s32.totalorder 2, %s33
      // Predicated region
      $region109: #{tpu_custom_call.1} parent=5 // pred_check
        %p1112 = pneg %p1111
      $region110: #{tpu_custom_call.1} parent=5 // pred_check_branch
        %1114 = sbr.rel (%p1112) target = $region112
      $region111: #{tpu_custom_call.1} parent=5 // pred_region
        %s1115 = ssub.s32 %s33, 2
        // Predicated region
        $region113: #{tpu_custom_call.1} parent=111 // pred_check
          %p1116 = pneg %p331
        $region114: #{tpu_custom_call.1} parent=111 // pred_check_branch
          %1118 = sbr.rel (%p1116) target = $region116
        $region115: #{tpu_custom_call.1} parent=111 // pred_region
          %s1119 = sand.u32 %s316, 1
          %s1120 = scalar_lea.sflag [#allocation6], %s1119
          %s1121 = sand.u32 %s316, 1
          %s1122 = smul.addr %s1121, 8
          %s1123 = scalar_lea.vmem [#allocation16], %s1122
          %1125 = dma.done %s1120, 128
        $region116: #{tpu_custom_call.1} parent=111 // pred_fallthru
          _
        // Predicated region
        $region117: #{tpu_custom_call.1} parent=111 // pred_check
          %p1126 = pneg %p361
        $region118: #{tpu_custom_call.1} parent=111 // pred_check_branch
          %1128 = sbr.rel (%p1126) target = $region120
        $region119: #{tpu_custom_call.1} parent=111 // pred_region
          %s1129 = sand.u32 %s346, 1
          %s1130 = scalar_lea.sflag [#allocation18], %s1129
          %s1131 = sand.u32 %s346, 1
          %s1132 = smul.addr %s1131, 32
          %s1133 = scalar_lea.vmem [#allocation17], %s1132
          %1135 = dma.done %s1130, 512
        $region120: #{tpu_custom_call.1} parent=111 // pred_fallthru
          _
      $region112: #{tpu_custom_call.1} parent=5 // pred_fallthru
        _
    $region6: #{tpu_custom_call.1} parent=1 // loop_footer
      %s37 = sadd.s32 1, %s33
    $region7: #{tpu_custom_call.1} parent=1 // loop_footer_branch
      %32 = sbr.rel target = $region3
    $region8: #{tpu_custom_call.1} parent=1 // loop_exit
      _
    %1136 = vsyncpa [#allocation5], 1
    %s1137 = scalar_lea.sflag [#allocation5], 1
    %1138 = vsyncpa %s1137, 1
    %1139 = vsyncpa [#allocation8], 1
    %s1140 = scalar_lea.sflag [#allocation8], 1
    %1141 = vsyncpa %s1140, 1
    %1142 = vsyncpa [#allocation11], 1
    %1143 = vsyncpa [#allocation14], 1
    %1144 = vsyncpa [#allocation6], 1
    %s1145 = scalar_lea.sflag [#allocation6], 1
    %1146 = vsyncpa %s1145, 1
    %1147 = vsyncpa [#allocation18], 1
    %s1148 = scalar_lea.sflag [#allocation18], 1
    %1149 = vsyncpa %s1148, 1

</llo_original>
